<compile_context>
chip_gen: v5e
topology: v5e:2x2
jax: 0.10.0
libtpu: 0.0.40
codegen_flags: <defaults>
</compile_context>

<pallas_src>
import jax
import jax.numpy as jnp
from jax.experimental import pallas as pl
from jax.experimental.pallas import tpu as pltpu


def _fused_lstm_call(x_flat, wih0_t, b0, wih_rest, whh_all, b_rest,
                     *, T, Bp, H, n_layer):
    """One pallas_call covering all layers and all timesteps.

    x_flat:   (T*Bp, D)  time-major, batch-padded input features.
    wih0_t:   (D, 4H)    layer-0 W_ih^T.
    b0:       (1, 4H)    layer-0 combined bias (b_ih + b_hh).
    wih_rest: (max(L-1,1), H, 4H) W_ih^T for layers 1..L-1 (dummy if L == 1).
    whh_all:  (L, H, 4H) W_hh^T for all layers.
    b_rest:   (max(L-1,1), 1, 4H) combined biases for layers 1..L-1.
    returns:  (T*Bp, H)  hidden sequence of the last layer (time-major, flat).
    """
    four_h = 4 * H
    D = x_flat.shape[1]
    L1 = wih_rest.shape[0]

    def kernel(x_ref, wih0_ref, b0_ref, wih_rest_ref, whh_ref, b_rest_ref,
               out_ref, gx_sc, seq_sc, h_sc, c_sc):
        # Layer-0 input projection, time-parallel: ONE MXU matmul over all steps.
        gx_sc[...] = (
            jnp.dot(x_ref[...], wih0_ref[...],
                    preferred_element_type=jnp.float32)
            + b0_ref[...]
        )

        for layer in range(n_layer):            # static unroll: n_layer is tiny
            h_sc[...] = jnp.zeros_like(h_sc)
            c_sc[...] = jnp.zeros_like(c_sc)
            w_hh = whh_ref[layer]               # (H, 4H), VMEM-resident

            for t in range(T):                  # static unroll of the recurrence
                h_prev = h_sc[...]
                c_prev = c_sc[...]
                # Only the recurrent matmul stays on the serial critical path;
                # the gx slice is a sublane-aligned (Bp, 4H) tile (Bp % 8 == 0).
                gates = gx_sc[t * Bp:(t + 1) * Bp, :] + jnp.dot(
                    h_prev, w_hh, preferred_element_type=jnp.float32)
                # Two full-vreg transcendentals instead of four narrow ones.
                sig = jax.nn.sigmoid(gates)
                tnh = jnp.tanh(gates)
                i_g = sig[:, 0 * H:1 * H]
                f_g = sig[:, 1 * H:2 * H]
                g_g = tnh[:, 2 * H:3 * H]
                o_g = sig[:, 3 * H:4 * H]
                c_new = f_g * c_prev + i_g * g_g
                h_new = o_g * jnp.tanh(c_new)
                c_sc[...] = c_new
                h_sc[...] = h_new
                seq_sc[t * Bp:(t + 1) * Bp, :] = h_new

            if layer + 1 < n_layer:
                # Time-parallel input projection for the next layer:
                # one (T*Bp, H) @ (H, 4H) MXU matmul instead of T tiny ones.
                gx_sc[...] = (
                    jnp.dot(seq_sc[...], wih_rest_ref[layer],
                            preferred_element_type=jnp.float32)
                    + b_rest_ref[layer]
                )

        out_ref[...] = seq_sc[...].astype(out_ref.dtype)

    return pl.pallas_call(
        kernel,
        out_shape=jax.ShapeDtypeStruct((T * Bp, H), jnp.float32),
        grid_spec=pltpu.PrefetchScalarGridSpec(
            num_scalar_prefetch=0,
            grid=(1,),
            in_specs=[
                pl.BlockSpec((T * Bp, D), lambda i: (0, 0)),              # x (time-major)
                pl.BlockSpec((D, four_h), lambda i: (0, 0)),              # W_ih^T layer 0
                pl.BlockSpec((1, four_h), lambda i: (0, 0)),              # bias layer 0
                pl.BlockSpec((L1, H, four_h), lambda i: (0, 0, 0)),       # W_ih^T layers>=1
                pl.BlockSpec((n_layer, H, four_h), lambda i: (0, 0, 0)),  # W_hh^T all layers
                pl.BlockSpec((L1, 1, four_h), lambda i: (0, 0, 0)),       # biases layers>=1
            ],
            out_specs=pl.BlockSpec((T * Bp, H), lambda i: (0, 0)),
            scratch_shapes=[
                pltpu.VMEM((T * Bp, four_h), jnp.float32),  # gx: input projections
                pltpu.VMEM((T * Bp, H), jnp.float32),       # inter-layer hidden seq
                pltpu.VMEM((Bp, H), jnp.float32),           # h state
                pltpu.VMEM((Bp, H), jnp.float32),           # c state
            ],
        ),
        compiler_params=pltpu.CompilerParams(
            dimension_semantics=("arbitrary",),             # recurrence: sequential
        ),
    )(x_flat, wih0_t, b0, wih_rest, whh_all, b_rest)


def _pack_params(params):
    """Pre-transpose / stack nn.LSTM-style weights once per forward."""
    n_layer = len(params)
    w_ih0, w_hh0, b_ih0, b_hh0 = params[0]
    H = w_hh0.shape[1]
    w_ih0_t = jnp.transpose(w_ih0)                        # (D, 4H)
    b0 = (b_ih0 + b_hh0)[None, :]                         # (1, 4H)
    whh_all = jnp.stack([jnp.transpose(p[1]) for p in params])  # (L, H, 4H)
    if n_layer > 1:
        wih_rest = jnp.stack([jnp.transpose(p[0]) for p in params[1:]])   # (L-1, H, 4H)
        b_rest = jnp.stack([(p[2] + p[3])[None, :] for p in params[1:]])  # (L-1, 1, 4H)
    else:
        wih_rest = jnp.zeros((1, H, 4 * H), jnp.float32)  # dummy, never read
        b_rest = jnp.zeros((1, 1, 4 * H), jnp.float32)
    return w_ih0_t, b0, wih_rest, whh_all, b_rest


@jax.jit
def vanilla_lstm_forward(feat, params):
    """feat: (B, T, input_size) batch-first, like the PyTorch module.
    params: tuple of (w_ih, w_hh, b_ih, b_hh) per layer (nn.LSTM shapes)."""
    B, T, D = feat.shape
    n_layer = len(params)
    H = params[0][1].shape[1]
    w_ih0_t, b0, wih_rest, whh_all, b_rest = _pack_params(params)

    # Time-major layout + pad batch to a sublane multiple so every per-step
    # slice inside the kernel is an aligned (8k, lanes) tile.  Padded rows are
    # independent LSTM rows and are discarded below.
    Bp = ((B + 7) // 8) * 8
    x_tm = jnp.transpose(feat, (1, 0, 2))                         # (T, B, D)
    x_tm = jnp.pad(x_tm, ((0, 0), (0, Bp - B), (0, 0)))           # (T, Bp, D)
    x_flat = x_tm.reshape(T * Bp, D).astype(jnp.float32)

    out_flat = _fused_lstm_call(x_flat, w_ih0_t, b0, wih_rest, whh_all, b_rest,
                                T=T, Bp=Bp, H=H, n_layer=n_layer)  # (T*Bp, H)
    out = out_flat.reshape(T, Bp, H)[:, :B, :]                     # strip padding
    return jnp.transpose(out, (1, 0, 2))                           # (B, T, H)


def init_lstm_params(key, input_size, hidden_size, n_layer):
    """Deterministic params matching nn.LSTM shapes (uniform(-1/sqrt(H), 1/sqrt(H)))."""
    bound = 1.0 / jnp.sqrt(jnp.float32(hidden_size))
    params = []
    for layer in range(n_layer):
        d_in = input_size if layer == 0 else hidden_size
        key, k0, k1, k2, k3 = jax.random.split(key, 5)
        w_ih = jax.random.uniform(k0, (4 * hidden_size, d_in), jnp.float32, -bound, bound)
        w_hh = jax.random.uniform(k1, (4 * hidden_size, hidden_size), jnp.float32, -bound, bound)
        b_ih = jax.random.uniform(k2, (4 * hidden_size,), jnp.float32, -bound, bound)
        b_hh = jax.random.uniform(k3, (4 * hidden_size,), jnp.float32, -bound, bound)
        params.append((w_ih, w_hh, b_ih, b_hh))
    return params


def _reference_lstm(feat, params):
    """Pure-JAX reference (lax.scan) replicating nn.LSTM eval forward."""
    x = jnp.transpose(feat, (1, 0, 2))  # (T, B, D)
    B = feat.shape[0]
    for (w_ih, w_hh, b_ih, b_hh) in params:
        H = w_hh.shape[1]
        h0 = jnp.zeros((B, H), jnp.float32)
        c0 = jnp.zeros((B, H), jnp.float32)

        def step(carry, x_t):
            h, c = carry
            gates = x_t @ w_ih.T + h @ w_hh.T + b_ih + b_hh
            i = jax.nn.sigmoid(gates[:, 0 * H:1 * H])
            f = jax.nn.sigmoid(gates[:, 1 * H:2 * H])
            g = jnp.tanh(gates[:, 2 * H:3 * H])
            o = jax.nn.sigmoid(gates[:, 3 * H:4 * H])
            c = f * c + i * g
            h = o * jnp.tanh(c)
            return (h, c), h

        _, x = jax.lax.scan(step, (h0, c0), x)
    return jnp.transpose(x, (1, 0, 2))


if __name__ == "__main__":
    # Small shapes consistent with the module: batch=2, seq=8, input=16, hidden=32.
    batch, seq, input_size, hidden_size, n_layer = 2, 8, 16, 32, 2
    dropout = 0.0  # inter-layer dropout is identity in eval mode

    key = jax.random.PRNGKey(0)
    key, kf = jax.random.split(key)
    feat = jax.random.normal(kf, (batch, seq, input_size), jnp.float32)

    params = tuple(init_lstm_params(key, input_size, hidden_size, n_layer))

    out = vanilla_lstm_forward(feat, params)
    out = jax.block_until_ready(out)

    ref = _reference_lstm(feat, params)
    assert out.shape == (batch, seq, hidden_size)
    assert jnp.allclose(out, ref, atol=1e-5, rtol=1e-5), "mismatch vs. reference LSTM"

    print("KERNEL_OK")
</pallas_src>

<mosaic_0001>
module attributes {stable_mosaic.version = 11 : i64} {
  func.func @kernel(%arg0: i32, %arg1: memref<64x16xf32, #tpu.memory_space<vmem>>, %arg2: memref<16x128xf32, #tpu.memory_space<vmem>>, %arg3: memref<1x128xf32, #tpu.memory_space<vmem>>, %arg4: memref<1x32x128xf32, #tpu.memory_space<vmem>>, %arg5: memref<2x32x128xf32, #tpu.memory_space<vmem>>, %arg6: memref<1x1x128xf32, #tpu.memory_space<vmem>>, %arg7: memref<64x32xf32, #tpu.memory_space<vmem>>, %arg8: memref<64x128xf32, #tpu.memory_space<vmem>>, %arg9: memref<64x32xf32, #tpu.memory_space<vmem>>, %arg10: memref<8x32xf32, #tpu.memory_space<vmem>>, %arg11: memref<8x32xf32, #tpu.memory_space<vmem>>) attributes {dimension_semantics = [#tpu.dimension_semantics<arbitrary>], iteration_bounds = array<i64: 1>, scalar_prefetch = 0 : i64, scratch_operands = 4 : i64, tpu.core_type = #tpu.core_type<tc>, window_params = [{pipeline_mode = #tpu.pipeline_mode<synchronous>, transform_indices = @transform_0, window_bounds = array<i64: 64, 16>}, {pipeline_mode = #tpu.pipeline_mode<synchronous>, transform_indices = @transform_1, window_bounds = array<i64: 16, 128>}, {pipeline_mode = #tpu.pipeline_mode<synchronous>, transform_indices = @transform_2, window_bounds = array<i64: 1, 128>}, {pipeline_mode = #tpu.pipeline_mode<synchronous>, transform_indices = @transform_3, window_bounds = array<i64: 1, 32, 128>}, {pipeline_mode = #tpu.pipeline_mode<synchronous>, transform_indices = @transform_4, window_bounds = array<i64: 2, 32, 128>}, {pipeline_mode = #tpu.pipeline_mode<synchronous>, transform_indices = @transform_5, window_bounds = array<i64: 1, 1, 128>}, {pipeline_mode = #tpu.pipeline_mode<synchronous>, transform_indices = @transform_6, window_bounds = array<i64: 64, 32>}]} {
    %c0 = arith.constant 0 : index
    %c0_0 = arith.constant 0 : index
    %0 = vector.load %arg1[%c0, %c0_0] : memref<64x16xf32, #tpu.memory_space<vmem>>, vector<64x16xf32>
    %c0_1 = arith.constant 0 : index
    %c0_2 = arith.constant 0 : index
    %1 = vector.load %arg2[%c0_1, %c0_2] : memref<16x128xf32, #tpu.memory_space<vmem>>, vector<16x128xf32>
    %cst = arith.constant dense<0.000000e+00> : vector<64x128xf32>
    %2 = tpu.matmul %0, %1, %cst {dimension_numbers = #tpu.dot_dimension_numbers<[1], [0], [0], [1], [0, 0, 1, 1], [], []>} : vector<64x16xf32>, vector<16x128xf32>, vector<64x128xf32> -> vector<64x128xf32>
    %c0_3 = arith.constant 0 : index
    %c0_4 = arith.constant 0 : index
    %3 = vector.load %arg3[%c0_3, %c0_4] : memref<1x128xf32, #tpu.memory_space<vmem>>, vector<1x128xf32>
    %4 = vector.broadcast %3 : vector<1x128xf32> to vector<64x128xf32>
    %5 = arith.addf %2, %4 : vector<64x128xf32>
    %c0_5 = arith.constant 0 : index
    %c0_6 = arith.constant 0 : index
    %6 = vector.load %arg8[%c0_5, %c0_6] : memref<64x128xf32, #tpu.memory_space<vmem>>, vector<64x128xf32>
    tpu.vector_store %arg8[%c0_5, %c0_6], %5 {strides = array<i32>} : memref<64x128xf32, #tpu.memory_space<vmem>>, vector<64x128xf32>,
    %cst_7 = arith.constant 0.000000e+00 : f32
    %7 = vector.broadcast %cst_7 : f32 to vector<8x32xf32>
    %c0_8 = arith.constant 0 : index
    %c0_9 = arith.constant 0 : index
    %8 = vector.load %arg10[%c0_8, %c0_9] : memref<8x32xf32, #tpu.memory_space<vmem>>, vector<8x32xf32>
    tpu.vector_store %arg10[%c0_8, %c0_9], %7 {strides = array<i32>} : memref<8x32xf32, #tpu.memory_space<vmem>>, vector<8x32xf32>,
    %cst_10 = arith.constant 0.000000e+00 : f32
    %9 = vector.broadcast %cst_10 : f32 to vector<8x32xf32>
    %c0_11 = arith.constant 0 : index
    %c0_12 = arith.constant 0 : index
    %10 = vector.load %arg11[%c0_11, %c0_12] : memref<8x32xf32, #tpu.memory_space<vmem>>, vector<8x32xf32>
    tpu.vector_store %arg11[%c0_11, %c0_12], %9 {strides = array<i32>} : memref<8x32xf32, #tpu.memory_space<vmem>>, vector<8x32xf32>,
    %c0_13 = arith.constant 0 : index
    %c0_14 = arith.constant 0 : index
    %c0_15 = arith.constant 0 : index
    %11 = vector.load %arg5[%c0_13, %c0_14, %c0_15] : memref<2x32x128xf32, #tpu.memory_space<vmem>>, vector<1x32x128xf32>
    %12 = vector.shape_cast %11 : vector<1x32x128xf32> to vector<32x128xf32>
    %c0_16 = arith.constant 0 : index
    %c0_17 = arith.constant 0 : index
    %13 = vector.load %arg10[%c0_16, %c0_17] : memref<8x32xf32, #tpu.memory_space<vmem>>, vector<8x32xf32>
    %c0_18 = arith.constant 0 : index
    %c0_19 = arith.constant 0 : index
    %14 = vector.load %arg11[%c0_18, %c0_19] : memref<8x32xf32, #tpu.memory_space<vmem>>, vector<8x32xf32>
    %c0_20 = arith.constant 0 : index
    %c0_21 = arith.constant 0 : index
    %15 = vector.load %arg8[%c0_20, %c0_21] : memref<64x128xf32, #tpu.memory_space<vmem>>, vector<8x128xf32>
    %cst_22 = arith.constant dense<0.000000e+00> : vector<8x128xf32>
    %16 = tpu.matmul %13, %12, %cst_22 {dimension_numbers = #tpu.dot_dimension_numbers<[1], [0], [0], [1], [0, 0, 1, 1], [], []>} : vector<8x32xf32>, vector<32x128xf32>, vector<8x128xf32> -> vector<8x128xf32>
    %17 = arith.addf %15, %16 : vector<8x128xf32>
    %18 = arith.negf %17 : vector<8x128xf32>
    %19 = math.exp %18 : vector<8x128xf32>
    %cst_23 = arith.constant 1.000000e+00 : f32
    %20 = vector.broadcast %cst_23 : f32 to vector<8x128xf32>
    %21 = arith.addf %20, %19 : vector<8x128xf32>
    %22 = arith.divf %20, %21 : vector<8x128xf32>
    %23 = math.tanh %17 : vector<8x128xf32>
    %24 = vector.extract_strided_slice %22 {offsets = [0, 0], sizes = [8, 32], strides = [1, 1]} : vector<8x128xf32> to vector<8x32xf32>
    %25 = vector.extract_strided_slice %22 {offsets = [0, 32], sizes = [8, 32], strides = [1, 1]} : vector<8x128xf32> to vector<8x32xf32>
    %26 = vector.extract_strided_slice %23 {offsets = [0, 64], sizes = [8, 32], strides = [1, 1]} : vector<8x128xf32> to vector<8x32xf32>
    %27 = vector.extract_strided_slice %22 {offsets = [0, 96], sizes = [8, 32], strides = [1, 1]} : vector<8x128xf32> to vector<8x32xf32>
    %28 = arith.mulf %25, %14 : vector<8x32xf32>
    %29 = arith.mulf %24, %26 : vector<8x32xf32>
    %30 = arith.addf %28, %29 : vector<8x32xf32>
    %31 = math.tanh %30 : vector<8x32xf32>
    %32 = arith.mulf %27, %31 : vector<8x32xf32>
    %c0_24 = arith.constant 0 : index
    %c0_25 = arith.constant 0 : index
    %33 = vector.load %arg11[%c0_24, %c0_25] : memref<8x32xf32, #tpu.memory_space<vmem>>, vector<8x32xf32>
    tpu.vector_store %arg11[%c0_24, %c0_25], %30 {strides = array<i32>} : memref<8x32xf32, #tpu.memory_space<vmem>>, vector<8x32xf32>,
    %c0_26 = arith.constant 0 : index
    %c0_27 = arith.constant 0 : index
    %34 = vector.load %arg10[%c0_26, %c0_27] : memref<8x32xf32, #tpu.memory_space<vmem>>, vector<8x32xf32>
    tpu.vector_store %arg10[%c0_26, %c0_27], %32 {strides = array<i32>} : memref<8x32xf32, #tpu.memory_space<vmem>>, vector<8x32xf32>,
    %c0_28 = arith.constant 0 : index
    %c0_29 = arith.constant 0 : index
    %35 = vector.load %arg9[%c0_28, %c0_29] : memref<64x32xf32, #tpu.memory_space<vmem>>, vector<8x32xf32>
    tpu.vector_store %arg9[%c0_28, %c0_29], %32 {strides = array<i32>} : memref<64x32xf32, #tpu.memory_space<vmem>>, vector<8x32xf32>,
    %c0_30 = arith.constant 0 : index
    %c0_31 = arith.constant 0 : index
    %36 = vector.load %arg10[%c0_30, %c0_31] : memref<8x32xf32, #tpu.memory_space<vmem>>, vector<8x32xf32>
    %c0_32 = arith.constant 0 : index
    %c0_33 = arith.constant 0 : index
    %37 = vector.load %arg11[%c0_32, %c0_33] : memref<8x32xf32, #tpu.memory_space<vmem>>, vector<8x32xf32>
    %c8 = arith.constant 8 : index
    %c0_34 = arith.constant 0 : index
    %38 = vector.load %arg8[%c8, %c0_34] : memref<64x128xf32, #tpu.memory_space<vmem>>, vector<8x128xf32>
    %cst_35 = arith.constant dense<0.000000e+00> : vector<8x128xf32>
    %39 = tpu.matmul %36, %12, %cst_35 {dimension_numbers = #tpu.dot_dimension_numbers<[1], [0], [0], [1], [0, 0, 1, 1], [], []>} : vector<8x32xf32>, vector<32x128xf32>, vector<8x128xf32> -> vector<8x128xf32>
    %40 = arith.addf %38, %39 : vector<8x128xf32>
    %41 = arith.negf %40 : vector<8x128xf32>
    %42 = math.exp %41 : vector<8x128xf32>
    %cst_36 = arith.constant 1.000000e+00 : f32
    %43 = vector.broadcast %cst_36 : f32 to vector<8x128xf32>
    %44 = arith.addf %43, %42 : vector<8x128xf32>
    %45 = arith.divf %43, %44 : vector<8x128xf32>
    %46 = math.tanh %40 : vector<8x128xf32>
    %47 = vector.extract_strided_slice %45 {offsets = [0, 0], sizes = [8, 32], strides = [1, 1]} : vector<8x128xf32> to vector<8x32xf32>
    %48 = vector.extract_strided_slice %45 {offsets = [0, 32], sizes = [8, 32], strides = [1, 1]} : vector<8x128xf32> to vector<8x32xf32>
    %49 = vector.extract_strided_slice %46 {offsets = [0, 64], sizes = [8, 32], strides = [1, 1]} : vector<8x128xf32> to vector<8x32xf32>
    %50 = vector.extract_strided_slice %45 {offsets = [0, 96], sizes = [8, 32], strides = [1, 1]} : vector<8x128xf32> to vector<8x32xf32>
    %51 = arith.mulf %48, %37 : vector<8x32xf32>
    %52 = arith.mulf %47, %49 : vector<8x32xf32>
    %53 = arith.addf %51, %52 : vector<8x32xf32>
    %54 = math.tanh %53 : vector<8x32xf32>
    %55 = arith.mulf %50, %54 : vector<8x32xf32>
    %c0_37 = arith.constant 0 : index
    %c0_38 = arith.constant 0 : index
    %56 = vector.load %arg11[%c0_37, %c0_38] : memref<8x32xf32, #tpu.memory_space<vmem>>, vector<8x32xf32>
    tpu.vector_store %arg11[%c0_37, %c0_38], %53 {strides = array<i32>} : memref<8x32xf32, #tpu.memory_space<vmem>>, vector<8x32xf32>,
    %c0_39 = arith.constant 0 : index
    %c0_40 = arith.constant 0 : index
    %57 = vector.load %arg10[%c0_39, %c0_40] : memref<8x32xf32, #tpu.memory_space<vmem>>, vector<8x32xf32>
    tpu.vector_store %arg10[%c0_39, %c0_40], %55 {strides = array<i32>} : memref<8x32xf32, #tpu.memory_space<vmem>>, vector<8x32xf32>,
    %c8_41 = arith.constant 8 : index
    %c0_42 = arith.constant 0 : index
    %58 = vector.load %arg9[%c8_41, %c0_42] : memref<64x32xf32, #tpu.memory_space<vmem>>, vector<8x32xf32>
    tpu.vector_store %arg9[%c8_41, %c0_42], %55 {strides = array<i32>} : memref<64x32xf32, #tpu.memory_space<vmem>>, vector<8x32xf32>,
    %c0_43 = arith.constant 0 : index
    %c0_44 = arith.constant 0 : index
    %59 = vector.load %arg10[%c0_43, %c0_44] : memref<8x32xf32, #tpu.memory_space<vmem>>, vector<8x32xf32>
    %c0_45 = arith.constant 0 : index
    %c0_46 = arith.constant 0 : index
    %60 = vector.load %arg11[%c0_45, %c0_46] : memref<8x32xf32, #tpu.memory_space<vmem>>, vector<8x32xf32>
    %c16 = arith.constant 16 : index
    %c0_47 = arith.constant 0 : index
    %61 = vector.load %arg8[%c16, %c0_47] : memref<64x128xf32, #tpu.memory_space<vmem>>, vector<8x128xf32>
    %cst_48 = arith.constant dense<0.000000e+00> : vector<8x128xf32>
    %62 = tpu.matmul %59, %12, %cst_48 {dimension_numbers = #tpu.dot_dimension_numbers<[1], [0], [0], [1], [0, 0, 1, 1], [], []>} : vector<8x32xf32>, vector<32x128xf32>, vector<8x128xf32> -> vector<8x128xf32>
    %63 = arith.addf %61, %62 : vector<8x128xf32>
    %64 = arith.negf %63 : vector<8x128xf32>
    %65 = math.exp %64 : vector<8x128xf32>
    %cst_49 = arith.constant 1.000000e+00 : f32
    %66 = vector.broadcast %cst_49 : f32 to vector<8x128xf32>
    %67 = arith.addf %66, %65 : vector<8x128xf32>
    %68 = arith.divf %66, %67 : vector<8x128xf32>
    %69 = math.tanh %63 : vector<8x128xf32>
    %70 = vector.extract_strided_slice %68 {offsets = [0, 0], sizes = [8, 32], strides = [1, 1]} : vector<8x128xf32> to vector<8x32xf32>
    %71 = vector.extract_strided_slice %68 {offsets = [0, 32], sizes = [8, 32], strides = [1, 1]} : vector<8x128xf32> to vector<8x32xf32>
    %72 = vector.extract_strided_slice %69 {offsets = [0, 64], sizes = [8, 32], strides = [1, 1]} : vector<8x128xf32> to vector<8x32xf32>
    %73 = vector.extract_strided_slice %68 {offsets = [0, 96], sizes = [8, 32], strides = [1, 1]} : vector<8x128xf32> to vector<8x32xf32>
    %74 = arith.mulf %71, %60 : vector<8x32xf32>
    %75 = arith.mulf %70, %72 : vector<8x32xf32>
    %76 = arith.addf %74, %75 : vector<8x32xf32>
    %77 = math.tanh %76 : vector<8x32xf32>
    %78 = arith.mulf %73, %77 : vector<8x32xf32>
    %c0_50 = arith.constant 0 : index
    %c0_51 = arith.constant 0 : index
    %79 = vector.load %arg11[%c0_50, %c0_51] : memref<8x32xf32, #tpu.memory_space<vmem>>, vector<8x32xf32>
    tpu.vector_store %arg11[%c0_50, %c0_51], %76 {strides = array<i32>} : memref<8x32xf32, #tpu.memory_space<vmem>>, vector<8x32xf32>,
    %c0_52 = arith.constant 0 : index
    %c0_53 = arith.constant 0 : index
    %80 = vector.load %arg10[%c0_52, %c0_53] : memref<8x32xf32, #tpu.memory_space<vmem>>, vector<8x32xf32>
    tpu.vector_store %arg10[%c0_52, %c0_53], %78 {strides = array<i32>} : memref<8x32xf32, #tpu.memory_space<vmem>>, vector<8x32xf32>,
    %c16_54 = arith.constant 16 : index
    %c0_55 = arith.constant 0 : index
    %81 = vector.load %arg9[%c16_54, %c0_55] : memref<64x32xf32, #tpu.memory_space<vmem>>, vector<8x32xf32>
    tpu.vector_store %arg9[%c16_54, %c0_55], %78 {strides = array<i32>} : memref<64x32xf32, #tpu.memory_space<vmem>>, vector<8x32xf32>,
    %c0_56 = arith.constant 0 : index
    %c0_57 = arith.constant 0 : index
    %82 = vector.load %arg10[%c0_56, %c0_57] : memref<8x32xf32, #tpu.memory_space<vmem>>, vector<8x32xf32>
    %c0_58 = arith.constant 0 : index
    %c0_59 = arith.constant 0 : index
    %83 = vector.load %arg11[%c0_58, %c0_59] : memref<8x32xf32, #tpu.memory_space<vmem>>, vector<8x32xf32>
    %c24 = arith.constant 24 : index
    %c0_60 = arith.constant 0 : index
    %84 = vector.load %arg8[%c24, %c0_60] : memref<64x128xf32, #tpu.memory_space<vmem>>, vector<8x128xf32>
    %cst_61 = arith.constant dense<0.000000e+00> : vector<8x128xf32>
    %85 = tpu.matmul %82, %12, %cst_61 {dimension_numbers = #tpu.dot_dimension_numbers<[1], [0], [0], [1], [0, 0, 1, 1], [], []>} : vector<8x32xf32>, vector<32x128xf32>, vector<8x128xf32> -> vector<8x128xf32>
    %86 = arith.addf %84, %85 : vector<8x128xf32>
    %87 = arith.negf %86 : vector<8x128xf32>
    %88 = math.exp %87 : vector<8x128xf32>
    %cst_62 = arith.constant 1.000000e+00 : f32
    %89 = vector.broadcast %cst_62 : f32 to vector<8x128xf32>
    %90 = arith.addf %89, %88 : vector<8x128xf32>
    %91 = arith.divf %89, %90 : vector<8x128xf32>
    %92 = math.tanh %86 : vector<8x128xf32>
    %93 = vector.extract_strided_slice %91 {offsets = [0, 0], sizes = [8, 32], strides = [1, 1]} : vector<8x128xf32> to vector<8x32xf32>
    %94 = vector.extract_strided_slice %91 {offsets = [0, 32], sizes = [8, 32], strides = [1, 1]} : vector<8x128xf32> to vector<8x32xf32>
    %95 = vector.extract_strided_slice %92 {offsets = [0, 64], sizes = [8, 32], strides = [1, 1]} : vector<8x128xf32> to vector<8x32xf32>
    %96 = vector.extract_strided_slice %91 {offsets = [0, 96], sizes = [8, 32], strides = [1, 1]} : vector<8x128xf32> to vector<8x32xf32>
    %97 = arith.mulf %94, %83 : vector<8x32xf32>
    %98 = arith.mulf %93, %95 : vector<8x32xf32>
    %99 = arith.addf %97, %98 : vector<8x32xf32>
    %100 = math.tanh %99 : vector<8x32xf32>
    %101 = arith.mulf %96, %100 : vector<8x32xf32>
    %c0_63 = arith.constant 0 : index
    %c0_64 = arith.constant 0 : index
    %102 = vector.load %arg11[%c0_63, %c0_64] : memref<8x32xf32, #tpu.memory_space<vmem>>, vector<8x32xf32>
    tpu.vector_store %arg11[%c0_63, %c0_64], %99 {strides = array<i32>} : memref<8x32xf32, #tpu.memory_space<vmem>>, vector<8x32xf32>,
    %c0_65 = arith.constant 0 : index
    %c0_66 = arith.constant 0 : index
    %103 = vector.load %arg10[%c0_65, %c0_66] : memref<8x32xf32, #tpu.memory_space<vmem>>, vector<8x32xf32>
    tpu.vector_store %arg10[%c0_65, %c0_66], %101 {strides = array<i32>} : memref<8x32xf32, #tpu.memory_space<vmem>>, vector<8x32xf32>,
    %c24_67 = arith.constant 24 : index
    %c0_68 = arith.constant 0 : index
    %104 = vector.load %arg9[%c24_67, %c0_68] : memref<64x32xf32, #tpu.memory_space<vmem>>, vector<8x32xf32>
    tpu.vector_store %arg9[%c24_67, %c0_68], %101 {strides = array<i32>} : memref<64x32xf32, #tpu.memory_space<vmem>>, vector<8x32xf32>,
    %c0_69 = arith.constant 0 : index
    %c0_70 = arith.constant 0 : index
    %105 = vector.load %arg10[%c0_69, %c0_70] : memref<8x32xf32, #tpu.memory_space<vmem>>, vector<8x32xf32>
    %c0_71 = arith.constant 0 : index
    %c0_72 = arith.constant 0 : index
    %106 = vector.load %arg11[%c0_71, %c0_72] : memref<8x32xf32, #tpu.memory_space<vmem>>, vector<8x32xf32>
    %c32 = arith.constant 32 : index
    %c0_73 = arith.constant 0 : index
    %107 = vector.load %arg8[%c32, %c0_73] : memref<64x128xf32, #tpu.memory_space<vmem>>, vector<8x128xf32>
    %cst_74 = arith.constant dense<0.000000e+00> : vector<8x128xf32>
    %108 = tpu.matmul %105, %12, %cst_74 {dimension_numbers = #tpu.dot_dimension_numbers<[1], [0], [0], [1], [0, 0, 1, 1], [], []>} : vector<8x32xf32>, vector<32x128xf32>, vector<8x128xf32> -> vector<8x128xf32>
    %109 = arith.addf %107, %108 : vector<8x128xf32>
    %110 = arith.negf %109 : vector<8x128xf32>
    %111 = math.exp %110 : vector<8x128xf32>
    %cst_75 = arith.constant 1.000000e+00 : f32
    %112 = vector.broadcast %cst_75 : f32 to vector<8x128xf32>
    %113 = arith.addf %112, %111 : vector<8x128xf32>
    %114 = arith.divf %112, %113 : vector<8x128xf32>
    %115 = math.tanh %109 : vector<8x128xf32>
    %116 = vector.extract_strided_slice %114 {offsets = [0, 0], sizes = [8, 32], strides = [1, 1]} : vector<8x128xf32> to vector<8x32xf32>
    %117 = vector.extract_strided_slice %114 {offsets = [0, 32], sizes = [8, 32], strides = [1, 1]} : vector<8x128xf32> to vector<8x32xf32>
    %118 = vector.extract_strided_slice %115 {offsets = [0, 64], sizes = [8, 32], strides = [1, 1]} : vector<8x128xf32> to vector<8x32xf32>
    %119 = vector.extract_strided_slice %114 {offsets = [0, 96], sizes = [8, 32], strides = [1, 1]} : vector<8x128xf32> to vector<8x32xf32>
    %120 = arith.mulf %117, %106 : vector<8x32xf32>
    %121 = arith.mulf %116, %118 : vector<8x32xf32>
    %122 = arith.addf %120, %121 : vector<8x32xf32>
    %123 = math.tanh %122 : vector<8x32xf32>
    %124 = arith.mulf %119, %123 : vector<8x32xf32>
    %c0_76 = arith.constant 0 : index
    %c0_77 = arith.constant 0 : index
    %125 = vector.load %arg11[%c0_76, %c0_77] : memref<8x32xf32, #tpu.memory_space<vmem>>, vector<8x32xf32>
    tpu.vector_store %arg11[%c0_76, %c0_77], %122 {strides = array<i32>} : memref<8x32xf32, #tpu.memory_space<vmem>>, vector<8x32xf32>,
    %c0_78 = arith.constant 0 : index
    %c0_79 = arith.constant 0 : index
    %126 = vector.load %arg10[%c0_78, %c0_79] : memref<8x32xf32, #tpu.memory_space<vmem>>, vector<8x32xf32>
    tpu.vector_store %arg10[%c0_78, %c0_79], %124 {strides = array<i32>} : memref<8x32xf32, #tpu.memory_space<vmem>>, vector<8x32xf32>,
    %c32_80 = arith.constant 32 : index
    %c0_81 = arith.constant 0 : index
    %127 = vector.load %arg9[%c32_80, %c0_81] : memref<64x32xf32, #tpu.memory_space<vmem>>, vector<8x32xf32>
    tpu.vector_store %arg9[%c32_80, %c0_81], %124 {strides = array<i32>} : memref<64x32xf32, #tpu.memory_space<vmem>>, vector<8x32xf32>,
    %c0_82 = arith.constant 0 : index
    %c0_83 = arith.constant 0 : index
    %128 = vector.load %arg10[%c0_82, %c0_83] : memref<8x32xf32, #tpu.memory_space<vmem>>, vector<8x32xf32>
    %c0_84 = arith.constant 0 : index
    %c0_85 = arith.constant 0 : index
    %129 = vector.load %arg11[%c0_84, %c0_85] : memref<8x32xf32, #tpu.memory_space<vmem>>, vector<8x32xf32>
    %c40 = arith.constant 40 : index
    %c0_86 = arith.constant 0 : index
    %130 = vector.load %arg8[%c40, %c0_86] : memref<64x128xf32, #tpu.memory_space<vmem>>, vector<8x128xf32>
    %cst_87 = arith.constant dense<0.000000e+00> : vector<8x128xf32>
    %131 = tpu.matmul %128, %12, %cst_87 {dimension_numbers = #tpu.dot_dimension_numbers<[1], [0], [0], [1], [0, 0, 1, 1], [], []>} : vector<8x32xf32>, vector<32x128xf32>, vector<8x128xf32> -> vector<8x128xf32>
    %132 = arith.addf %130, %131 : vector<8x128xf32>
    %133 = arith.negf %132 : vector<8x128xf32>
    %134 = math.exp %133 : vector<8x128xf32>
    %cst_88 = arith.constant 1.000000e+00 : f32
    %135 = vector.broadcast %cst_88 : f32 to vector<8x128xf32>
    %136 = arith.addf %135, %134 : vector<8x128xf32>
    %137 = arith.divf %135, %136 : vector<8x128xf32>
    %138 = math.tanh %132 : vector<8x128xf32>
    %139 = vector.extract_strided_slice %137 {offsets = [0, 0], sizes = [8, 32], strides = [1, 1]} : vector<8x128xf32> to vector<8x32xf32>
    %140 = vector.extract_strided_slice %137 {offsets = [0, 32], sizes = [8, 32], strides = [1, 1]} : vector<8x128xf32> to vector<8x32xf32>
    %141 = vector.extract_strided_slice %138 {offsets = [0, 64], sizes = [8, 32], strides = [1, 1]} : vector<8x128xf32> to vector<8x32xf32>
    %142 = vector.extract_strided_slice %137 {offsets = [0, 96], sizes = [8, 32], strides = [1, 1]} : vector<8x128xf32> to vector<8x32xf32>
    %143 = arith.mulf %140, %129 : vector<8x32xf32>
    %144 = arith.mulf %139, %141 : vector<8x32xf32>
    %145 = arith.addf %143, %144 : vector<8x32xf32>
    %146 = math.tanh %145 : vector<8x32xf32>
    %147 = arith.mulf %142, %146 : vector<8x32xf32>
    %c0_89 = arith.constant 0 : index
    %c0_90 = arith.constant 0 : index
    %148 = vector.load %arg11[%c0_89, %c0_90] : memref<8x32xf32, #tpu.memory_space<vmem>>, vector<8x32xf32>
    tpu.vector_store %arg11[%c0_89, %c0_90], %145 {strides = array<i32>} : memref<8x32xf32, #tpu.memory_space<vmem>>, vector<8x32xf32>,
    %c0_91 = arith.constant 0 : index
    %c0_92 = arith.constant 0 : index
    %149 = vector.load %arg10[%c0_91, %c0_92] : memref<8x32xf32, #tpu.memory_space<vmem>>, vector<8x32xf32>
    tpu.vector_store %arg10[%c0_91, %c0_92], %147 {strides = array<i32>} : memref<8x32xf32, #tpu.memory_space<vmem>>, vector<8x32xf32>,
    %c40_93 = arith.constant 40 : index
    %c0_94 = arith.constant 0 : index
    %150 = vector.load %arg9[%c40_93, %c0_94] : memref<64x32xf32, #tpu.memory_space<vmem>>, vector<8x32xf32>
    tpu.vector_store %arg9[%c40_93, %c0_94], %147 {strides = array<i32>} : memref<64x32xf32, #tpu.memory_space<vmem>>, vector<8x32xf32>,
    %c0_95 = arith.constant 0 : index
    %c0_96 = arith.constant 0 : index
    %151 = vector.load %arg10[%c0_95, %c0_96] : memref<8x32xf32, #tpu.memory_space<vmem>>, vector<8x32xf32>
    %c0_97 = arith.constant 0 : index
    %c0_98 = arith.constant 0 : index
    %152 = vector.load %arg11[%c0_97, %c0_98] : memref<8x32xf32, #tpu.memory_space<vmem>>, vector<8x32xf32>
    %c48 = arith.constant 48 : index
    %c0_99 = arith.constant 0 : index
    %153 = vector.load %arg8[%c48, %c0_99] : memref<64x128xf32, #tpu.memory_space<vmem>>, vector<8x128xf32>
    %cst_100 = arith.constant dense<0.000000e+00> : vector<8x128xf32>
    %154 = tpu.matmul %151, %12, %cst_100 {dimension_numbers = #tpu.dot_dimension_numbers<[1], [0], [0], [1], [0, 0, 1, 1], [], []>} : vector<8x32xf32>, vector<32x128xf32>, vector<8x128xf32> -> vector<8x128xf32>
    %155 = arith.addf %153, %154 : vector<8x128xf32>
    %156 = arith.negf %155 : vector<8x128xf32>
    %157 = math.exp %156 : vector<8x128xf32>
    %cst_101 = arith.constant 1.000000e+00 : f32
    %158 = vector.broadcast %cst_101 : f32 to vector<8x128xf32>
    %159 = arith.addf %158, %157 : vector<8x128xf32>
    %160 = arith.divf %158, %159 : vector<8x128xf32>
    %161 = math.tanh %155 : vector<8x128xf32>
    %162 = vector.extract_strided_slice %160 {offsets = [0, 0], sizes = [8, 32], strides = [1, 1]} : vector<8x128xf32> to vector<8x32xf32>
    %163 = vector.extract_strided_slice %160 {offsets = [0, 32], sizes = [8, 32], strides = [1, 1]} : vector<8x128xf32> to vector<8x32xf32>
    %164 = vector.extract_strided_slice %161 {offsets = [0, 64], sizes = [8, 32], strides = [1, 1]} : vector<8x128xf32> to vector<8x32xf32>
    %165 = vector.extract_strided_slice %160 {offsets = [0, 96], sizes = [8, 32], strides = [1, 1]} : vector<8x128xf32> to vector<8x32xf32>
    %166 = arith.mulf %163, %152 : vector<8x32xf32>
    %167 = arith.mulf %162, %164 : vector<8x32xf32>
    %168 = arith.addf %166, %167 : vector<8x32xf32>
    %169 = math.tanh %168 : vector<8x32xf32>
    %170 = arith.mulf %165, %169 : vector<8x32xf32>
    %c0_102 = arith.constant 0 : index
    %c0_103 = arith.constant 0 : index
    %171 = vector.load %arg11[%c0_102, %c0_103] : memref<8x32xf32, #tpu.memory_space<vmem>>, vector<8x32xf32>
    tpu.vector_store %arg11[%c0_102, %c0_103], %168 {strides = array<i32>} : memref<8x32xf32, #tpu.memory_space<vmem>>, vector<8x32xf32>,
    %c0_104 = arith.constant 0 : index
    %c0_105 = arith.constant 0 : index
    %172 = vector.load %arg10[%c0_104, %c0_105] : memref<8x32xf32, #tpu.memory_space<vmem>>, vector<8x32xf32>
    tpu.vector_store %arg10[%c0_104, %c0_105], %170 {strides = array<i32>} : memref<8x32xf32, #tpu.memory_space<vmem>>, vector<8x32xf32>,
    %c48_106 = arith.constant 48 : index
    %c0_107 = arith.constant 0 : index
    %173 = vector.load %arg9[%c48_106, %c0_107] : memref<64x32xf32, #tpu.memory_space<vmem>>, vector<8x32xf32>
    tpu.vector_store %arg9[%c48_106, %c0_107], %170 {strides = array<i32>} : memref<64x32xf32, #tpu.memory_space<vmem>>, vector<8x32xf32>,
    %c0_108 = arith.constant 0 : index
    %c0_109 = arith.constant 0 : index
    %174 = vector.load %arg10[%c0_108, %c0_109] : memref<8x32xf32, #tpu.memory_space<vmem>>, vector<8x32xf32>
    %c0_110 = arith.constant 0 : index
    %c0_111 = arith.constant 0 : index
    %175 = vector.load %arg11[%c0_110, %c0_111] : memref<8x32xf32, #tpu.memory_space<vmem>>, vector<8x32xf32>
    %c56 = arith.constant 56 : index
    %c0_112 = arith.constant 0 : index
    %176 = vector.load %arg8[%c56, %c0_112] : memref<64x128xf32, #tpu.memory_space<vmem>>, vector<8x128xf32>
    %cst_113 = arith.constant dense<0.000000e+00> : vector<8x128xf32>
    %177 = tpu.matmul %174, %12, %cst_113 {dimension_numbers = #tpu.dot_dimension_numbers<[1], [0], [0], [1], [0, 0, 1, 1], [], []>} : vector<8x32xf32>, vector<32x128xf32>, vector<8x128xf32> -> vector<8x128xf32>
    %178 = arith.addf %176, %177 : vector<8x128xf32>
    %179 = arith.negf %178 : vector<8x128xf32>
    %180 = math.exp %179 : vector<8x128xf32>
    %cst_114 = arith.constant 1.000000e+00 : f32
    %181 = vector.broadcast %cst_114 : f32 to vector<8x128xf32>
    %182 = arith.addf %181, %180 : vector<8x128xf32>
    %183 = arith.divf %181, %182 : vector<8x128xf32>
    %184 = math.tanh %178 : vector<8x128xf32>
    %185 = vector.extract_strided_slice %183 {offsets = [0, 0], sizes = [8, 32], strides = [1, 1]} : vector<8x128xf32> to vector<8x32xf32>
    %186 = vector.extract_strided_slice %183 {offsets = [0, 32], sizes = [8, 32], strides = [1, 1]} : vector<8x128xf32> to vector<8x32xf32>
    %187 = vector.extract_strided_slice %184 {offsets = [0, 64], sizes = [8, 32], strides = [1, 1]} : vector<8x128xf32> to vector<8x32xf32>
    %188 = vector.extract_strided_slice %183 {offsets = [0, 96], sizes = [8, 32], strides = [1, 1]} : vector<8x128xf32> to vector<8x32xf32>
    %189 = arith.mulf %186, %175 : vector<8x32xf32>
    %190 = arith.mulf %185, %187 : vector<8x32xf32>
    %191 = arith.addf %189, %190 : vector<8x32xf32>
    %192 = math.tanh %191 : vector<8x32xf32>
    %193 = arith.mulf %188, %192 : vector<8x32xf32>
    %c0_115 = arith.constant 0 : index
    %c0_116 = arith.constant 0 : index
    %194 = vector.load %arg11[%c0_115, %c0_116] : memref<8x32xf32, #tpu.memory_space<vmem>>, vector<8x32xf32>
    tpu.vector_store %arg11[%c0_115, %c0_116], %191 {strides = array<i32>} : memref<8x32xf32, #tpu.memory_space<vmem>>, vector<8x32xf32>,
    %c0_117 = arith.constant 0 : index
    %c0_118 = arith.constant 0 : index
    %195 = vector.load %arg10[%c0_117, %c0_118] : memref<8x32xf32, #tpu.memory_space<vmem>>, vector<8x32xf32>
    tpu.vector_store %arg10[%c0_117, %c0_118], %193 {strides = array<i32>} : memref<8x32xf32, #tpu.memory_space<vmem>>, vector<8x32xf32>,
    %c56_119 = arith.constant 56 : index
    %c0_120 = arith.constant 0 : index
    %196 = vector.load %arg9[%c56_119, %c0_120] : memref<64x32xf32, #tpu.memory_space<vmem>>, vector<8x32xf32>
    tpu.vector_store %arg9[%c56_119, %c0_120], %193 {strides = array<i32>} : memref<64x32xf32, #tpu.memory_space<vmem>>, vector<8x32xf32>,
    %c0_121 = arith.constant 0 : index
    %c0_122 = arith.constant 0 : index
    %197 = vector.load %arg9[%c0_121, %c0_122] : memref<64x32xf32, #tpu.memory_space<vmem>>, vector<64x32xf32>
    %c0_123 = arith.constant 0 : index
    %c0_124 = arith.constant 0 : index
    %c0_125 = arith.constant 0 : index
    %198 = vector.load %arg4[%c0_123, %c0_124, %c0_125] : memref<1x32x128xf32, #tpu.memory_space<vmem>>, vector<1x32x128xf32>
    %199 = vector.shape_cast %198 : vector<1x32x128xf32> to vector<32x128xf32>
    %cst_126 = arith.constant dense<0.000000e+00> : vector<64x128xf32>
    %200 = tpu.matmul %197, %199, %cst_126 {dimension_numbers = #tpu.dot_dimension_numbers<[1], [0], [0], [1], [0, 0, 1, 1], [], []>} : vector<64x32xf32>, vector<32x128xf32>, vector<64x128xf32> -> vector<64x128xf32>
    %c0_127 = arith.constant 0 : index
    %c0_128 = arith.constant 0 : index
    %c0_129 = arith.constant 0 : index
    %201 = vector.load %arg6[%c0_127, %c0_128, %c0_129] : memref<1x1x128xf32, #tpu.memory_space<vmem>>, vector<1x1x128xf32>
    %202 = vector.shape_cast %201 : vector<1x1x128xf32> to vector<1x128xf32>
    %203 = vector.broadcast %202 : vector<1x128xf32> to vector<64x128xf32>
    %204 = arith.addf %200, %203 : vector<64x128xf32>
    %c0_130 = arith.constant 0 : index
    %c0_131 = arith.constant 0 : index
    %205 = vector.load %arg8[%c0_130, %c0_131] : memref<64x128xf32, #tpu.memory_space<vmem>>, vector<64x128xf32>
    tpu.vector_store %arg8[%c0_130, %c0_131], %204 {strides = array<i32>} : memref<64x128xf32, #tpu.memory_space<vmem>>, vector<64x128xf32>,
    %cst_132 = arith.constant 0.000000e+00 : f32
    %206 = vector.broadcast %cst_132 : f32 to vector<8x32xf32>
    %c0_133 = arith.constant 0 : index
    %c0_134 = arith.constant 0 : index
    %207 = vector.load %arg10[%c0_133, %c0_134] : memref<8x32xf32, #tpu.memory_space<vmem>>, vector<8x32xf32>
    tpu.vector_store %arg10[%c0_133, %c0_134], %206 {strides = array<i32>} : memref<8x32xf32, #tpu.memory_space<vmem>>, vector<8x32xf32>,
    %cst_135 = arith.constant 0.000000e+00 : f32
    %208 = vector.broadcast %cst_135 : f32 to vector<8x32xf32>
    %c0_136 = arith.constant 0 : index
    %c0_137 = arith.constant 0 : index
    %209 = vector.load %arg11[%c0_136, %c0_137] : memref<8x32xf32, #tpu.memory_space<vmem>>, vector<8x32xf32>
    tpu.vector_store %arg11[%c0_136, %c0_137], %208 {strides = array<i32>} : memref<8x32xf32, #tpu.memory_space<vmem>>, vector<8x32xf32>,
    %c1 = arith.constant 1 : index
    %c0_138 = arith.constant 0 : index
    %c0_139 = arith.constant 0 : index
    %210 = vector.load %arg5[%c1, %c0_138, %c0_139] : memref<2x32x128xf32, #tpu.memory_space<vmem>>, vector<1x32x128xf32>
    %211 = vector.shape_cast %210 : vector<1x32x128xf32> to vector<32x128xf32>
    %c0_140 = arith.constant 0 : index
    %c0_141 = arith.constant 0 : index
    %212 = vector.load %arg10[%c0_140, %c0_141] : memref<8x32xf32, #tpu.memory_space<vmem>>, vector<8x32xf32>
    %c0_142 = arith.constant 0 : index
    %c0_143 = arith.constant 0 : index
    %213 = vector.load %arg11[%c0_142, %c0_143] : memref<8x32xf32, #tpu.memory_space<vmem>>, vector<8x32xf32>
    %c0_144 = arith.constant 0 : index
    %c0_145 = arith.constant 0 : index
    %214 = vector.load %arg8[%c0_144, %c0_145] : memref<64x128xf32, #tpu.memory_space<vmem>>, vector<8x128xf32>
    %cst_146 = arith.constant dense<0.000000e+00> : vector<8x128xf32>
    %215 = tpu.matmul %212, %211, %cst_146 {dimension_numbers = #tpu.dot_dimension_numbers<[1], [0], [0], [1], [0, 0, 1, 1], [], []>} : vector<8x32xf32>, vector<32x128xf32>, vector<8x128xf32> -> vector<8x128xf32>
    %216 = arith.addf %214, %215 : vector<8x128xf32>
    %217 = arith.negf %216 : vector<8x128xf32>
    %218 = math.exp %217 : vector<8x128xf32>
    %cst_147 = arith.constant 1.000000e+00 : f32
    %219 = vector.broadcast %cst_147 : f32 to vector<8x128xf32>
    %220 = arith.addf %219, %218 : vector<8x128xf32>
    %221 = arith.divf %219, %220 : vector<8x128xf32>
    %222 = math.tanh %216 : vector<8x128xf32>
    %223 = vector.extract_strided_slice %221 {offsets = [0, 0], sizes = [8, 32], strides = [1, 1]} : vector<8x128xf32> to vector<8x32xf32>
    %224 = vector.extract_strided_slice %221 {offsets = [0, 32], sizes = [8, 32], strides = [1, 1]} : vector<8x128xf32> to vector<8x32xf32>
    %225 = vector.extract_strided_slice %222 {offsets = [0, 64], sizes = [8, 32], strides = [1, 1]} : vector<8x128xf32> to vector<8x32xf32>
    %226 = vector.extract_strided_slice %221 {offsets = [0, 96], sizes = [8, 32], strides = [1, 1]} : vector<8x128xf32> to vector<8x32xf32>
    %227 = arith.mulf %224, %213 : vector<8x32xf32>
    %228 = arith.mulf %223, %225 : vector<8x32xf32>
    %229 = arith.addf %227, %228 : vector<8x32xf32>
    %230 = math.tanh %229 : vector<8x32xf32>
    %231 = arith.mulf %226, %230 : vector<8x32xf32>
    %c0_148 = arith.constant 0 : index
    %c0_149 = arith.constant 0 : index
    %232 = vector.load %arg11[%c0_148, %c0_149] : memref<8x32xf32, #tpu.memory_space<vmem>>, vector<8x32xf32>
    tpu.vector_store %arg11[%c0_148, %c0_149], %229 {strides = array<i32>} : memref<8x32xf32, #tpu.memory_space<vmem>>, vector<8x32xf32>,
    %c0_150 = arith.constant 0 : index
    %c0_151 = arith.constant 0 : index
    %233 = vector.load %arg10[%c0_150, %c0_151] : memref<8x32xf32, #tpu.memory_space<vmem>>, vector<8x32xf32>
    tpu.vector_store %arg10[%c0_150, %c0_151], %231 {strides = array<i32>} : memref<8x32xf32, #tpu.memory_space<vmem>>, vector<8x32xf32>,
    %c0_152 = arith.constant 0 : index
    %c0_153 = arith.constant 0 : index
    %234 = vector.load %arg9[%c0_152, %c0_153] : memref<64x32xf32, #tpu.memory_space<vmem>>, vector<8x32xf32>
    tpu.vector_store %arg9[%c0_152, %c0_153], %231 {strides = array<i32>} : memref<64x32xf32, #tpu.memory_space<vmem>>, vector<8x32xf32>,
    %c0_154 = arith.constant 0 : index
    %c0_155 = arith.constant 0 : index
    %235 = vector.load %arg10[%c0_154, %c0_155] : memref<8x32xf32, #tpu.memory_space<vmem>>, vector<8x32xf32>
    %c0_156 = arith.constant 0 : index
    %c0_157 = arith.constant 0 : index
    %236 = vector.load %arg11[%c0_156, %c0_157] : memref<8x32xf32, #tpu.memory_space<vmem>>, vector<8x32xf32>
    %c8_158 = arith.constant 8 : index
    %c0_159 = arith.constant 0 : index
    %237 = vector.load %arg8[%c8_158, %c0_159] : memref<64x128xf32, #tpu.memory_space<vmem>>, vector<8x128xf32>
    %cst_160 = arith.constant dense<0.000000e+00> : vector<8x128xf32>
    %238 = tpu.matmul %235, %211, %cst_160 {dimension_numbers = #tpu.dot_dimension_numbers<[1], [0], [0], [1], [0, 0, 1, 1], [], []>} : vector<8x32xf32>, vector<32x128xf32>, vector<8x128xf32> -> vector<8x128xf32>
    %239 = arith.addf %237, %238 : vector<8x128xf32>
    %240 = arith.negf %239 : vector<8x128xf32>
    %241 = math.exp %240 : vector<8x128xf32>
    %cst_161 = arith.constant 1.000000e+00 : f32
    %242 = vector.broadcast %cst_161 : f32 to vector<8x128xf32>
    %243 = arith.addf %242, %241 : vector<8x128xf32>
    %244 = arith.divf %242, %243 : vector<8x128xf32>
    %245 = math.tanh %239 : vector<8x128xf32>
    %246 = vector.extract_strided_slice %244 {offsets = [0, 0], sizes = [8, 32], strides = [1, 1]} : vector<8x128xf32> to vector<8x32xf32>
    %247 = vector.extract_strided_slice %244 {offsets = [0, 32], sizes = [8, 32], strides = [1, 1]} : vector<8x128xf32> to vector<8x32xf32>
    %248 = vector.extract_strided_slice %245 {offsets = [0, 64], sizes = [8, 32], strides = [1, 1]} : vector<8x128xf32> to vector<8x32xf32>
    %249 = vector.extract_strided_slice %244 {offsets = [0, 96], sizes = [8, 32], strides = [1, 1]} : vector<8x128xf32> to vector<8x32xf32>
    %250 = arith.mulf %247, %236 : vector<8x32xf32>
    %251 = arith.mulf %246, %248 : vector<8x32xf32>
    %252 = arith.addf %250, %251 : vector<8x32xf32>
    %253 = math.tanh %252 : vector<8x32xf32>
    %254 = arith.mulf %249, %253 : vector<8x32xf32>
    %c0_162 = arith.constant 0 : index
    %c0_163 = arith.constant 0 : index
    %255 = vector.load %arg11[%c0_162, %c0_163] : memref<8x32xf32, #tpu.memory_space<vmem>>, vector<8x32xf32>
    tpu.vector_store %arg11[%c0_162, %c0_163], %252 {strides = array<i32>} : memref<8x32xf32, #tpu.memory_space<vmem>>, vector<8x32xf32>,
    %c0_164 = arith.constant 0 : index
    %c0_165 = arith.constant 0 : index
    %256 = vector.load %arg10[%c0_164, %c0_165] : memref<8x32xf32, #tpu.memory_space<vmem>>, vector<8x32xf32>
    tpu.vector_store %arg10[%c0_164, %c0_165], %254 {strides = array<i32>} : memref<8x32xf32, #tpu.memory_space<vmem>>, vector<8x32xf32>,
    %c8_166 = arith.constant 8 : index
    %c0_167 = arith.constant 0 : index
    %257 = vector.load %arg9[%c8_166, %c0_167] : memref<64x32xf32, #tpu.memory_space<vmem>>, vector<8x32xf32>
    tpu.vector_store %arg9[%c8_166, %c0_167], %254 {strides = array<i32>} : memref<64x32xf32, #tpu.memory_space<vmem>>, vector<8x32xf32>,
    %c0_168 = arith.constant 0 : index
    %c0_169 = arith.constant 0 : index
    %258 = vector.load %arg10[%c0_168, %c0_169] : memref<8x32xf32, #tpu.memory_space<vmem>>, vector<8x32xf32>
    %c0_170 = arith.constant 0 : index
    %c0_171 = arith.constant 0 : index
    %259 = vector.load %arg11[%c0_170, %c0_171] : memref<8x32xf32, #tpu.memory_space<vmem>>, vector<8x32xf32>
    %c16_172 = arith.constant 16 : index
    %c0_173 = arith.constant 0 : index
    %260 = vector.load %arg8[%c16_172, %c0_173] : memref<64x128xf32, #tpu.memory_space<vmem>>, vector<8x128xf32>
    %cst_174 = arith.constant dense<0.000000e+00> : vector<8x128xf32>
    %261 = tpu.matmul %258, %211, %cst_174 {dimension_numbers = #tpu.dot_dimension_numbers<[1], [0], [0], [1], [0, 0, 1, 1], [], []>} : vector<8x32xf32>, vector<32x128xf32>, vector<8x128xf32> -> vector<8x128xf32>
    %262 = arith.addf %260, %261 : vector<8x128xf32>
    %263 = arith.negf %262 : vector<8x128xf32>
    %264 = math.exp %263 : vector<8x128xf32>
    %cst_175 = arith.constant 1.000000e+00 : f32
    %265 = vector.broadcast %cst_175 : f32 to vector<8x128xf32>
    %266 = arith.addf %265, %264 : vector<8x128xf32>
    %267 = arith.divf %265, %266 : vector<8x128xf32>
    %268 = math.tanh %262 : vector<8x128xf32>
    %269 = vector.extract_strided_slice %267 {offsets = [0, 0], sizes = [8, 32], strides = [1, 1]} : vector<8x128xf32> to vector<8x32xf32>
    %270 = vector.extract_strided_slice %267 {offsets = [0, 32], sizes = [8, 32], strides = [1, 1]} : vector<8x128xf32> to vector<8x32xf32>
    %271 = vector.extract_strided_slice %268 {offsets = [0, 64], sizes = [8, 32], strides = [1, 1]} : vector<8x128xf32> to vector<8x32xf32>
    %272 = vector.extract_strided_slice %267 {offsets = [0, 96], sizes = [8, 32], strides = [1, 1]} : vector<8x128xf32> to vector<8x32xf32>
    %273 = arith.mulf %270, %259 : vector<8x32xf32>
    %274 = arith.mulf %269, %271 : vector<8x32xf32>
    %275 = arith.addf %273, %274 : vector<8x32xf32>
    %276 = math.tanh %275 : vector<8x32xf32>
    %277 = arith.mulf %272, %276 : vector<8x32xf32>
    %c0_176 = arith.constant 0 : index
    %c0_177 = arith.constant 0 : index
    %278 = vector.load %arg11[%c0_176, %c0_177] : memref<8x32xf32, #tpu.memory_space<vmem>>, vector<8x32xf32>
    tpu.vector_store %arg11[%c0_176, %c0_177], %275 {strides = array<i32>} : memref<8x32xf32, #tpu.memory_space<vmem>>, vector<8x32xf32>,
    %c0_178 = arith.constant 0 : index
    %c0_179 = arith.constant 0 : index
    %279 = vector.load %arg10[%c0_178, %c0_179] : memref<8x32xf32, #tpu.memory_space<vmem>>, vector<8x32xf32>
    tpu.vector_store %arg10[%c0_178, %c0_179], %277 {strides = array<i32>} : memref<8x32xf32, #tpu.memory_space<vmem>>, vector<8x32xf32>,
    %c16_180 = arith.constant 16 : index
    %c0_181 = arith.constant 0 : index
    %280 = vector.load %arg9[%c16_180, %c0_181] : memref<64x32xf32, #tpu.memory_space<vmem>>, vector<8x32xf32>
    tpu.vector_store %arg9[%c16_180, %c0_181], %277 {strides = array<i32>} : memref<64x32xf32, #tpu.memory_space<vmem>>, vector<8x32xf32>,
    %c0_182 = arith.constant 0 : index
    %c0_183 = arith.constant 0 : index
    %281 = vector.load %arg10[%c0_182, %c0_183] : memref<8x32xf32, #tpu.memory_space<vmem>>, vector<8x32xf32>
    %c0_184 = arith.constant 0 : index
    %c0_185 = arith.constant 0 : index
    %282 = vector.load %arg11[%c0_184, %c0_185] : memref<8x32xf32, #tpu.memory_space<vmem>>, vector<8x32xf32>
    %c24_186 = arith.constant 24 : index
    %c0_187 = arith.constant 0 : index
    %283 = vector.load %arg8[%c24_186, %c0_187] : memref<64x128xf32, #tpu.memory_space<vmem>>, vector<8x128xf32>
    %cst_188 = arith.constant dense<0.000000e+00> : vector<8x128xf32>
    %284 = tpu.matmul %281, %211, %cst_188 {dimension_numbers = #tpu.dot_dimension_numbers<[1], [0], [0], [1], [0, 0, 1, 1], [], []>} : vector<8x32xf32>, vector<32x128xf32>, vector<8x128xf32> -> vector<8x128xf32>
    %285 = arith.addf %283, %284 : vector<8x128xf32>
    %286 = arith.negf %285 : vector<8x128xf32>
    %287 = math.exp %286 : vector<8x128xf32>
    %cst_189 = arith.constant 1.000000e+00 : f32
    %288 = vector.broadcast %cst_189 : f32 to vector<8x128xf32>
    %289 = arith.addf %288, %287 : vector<8x128xf32>
    %290 = arith.divf %288, %289 : vector<8x128xf32>
    %291 = math.tanh %285 : vector<8x128xf32>
    %292 = vector.extract_strided_slice %290 {offsets = [0, 0], sizes = [8, 32], strides = [1, 1]} : vector<8x128xf32> to vector<8x32xf32>
    %293 = vector.extract_strided_slice %290 {offsets = [0, 32], sizes = [8, 32], strides = [1, 1]} : vector<8x128xf32> to vector<8x32xf32>
    %294 = vector.extract_strided_slice %291 {offsets = [0, 64], sizes = [8, 32], strides = [1, 1]} : vector<8x128xf32> to vector<8x32xf32>
    %295 = vector.extract_strided_slice %290 {offsets = [0, 96], sizes = [8, 32], strides = [1, 1]} : vector<8x128xf32> to vector<8x32xf32>
    %296 = arith.mulf %293, %282 : vector<8x32xf32>
    %297 = arith.mulf %292, %294 : vector<8x32xf32>
    %298 = arith.addf %296, %297 : vector<8x32xf32>
    %299 = math.tanh %298 : vector<8x32xf32>
    %300 = arith.mulf %295, %299 : vector<8x32xf32>
    %c0_190 = arith.constant 0 : index
    %c0_191 = arith.constant 0 : index
    %301 = vector.load %arg11[%c0_190, %c0_191] : memref<8x32xf32, #tpu.memory_space<vmem>>, vector<8x32xf32>
    tpu.vector_store %arg11[%c0_190, %c0_191], %298 {strides = array<i32>} : memref<8x32xf32, #tpu.memory_space<vmem>>, vector<8x32xf32>,
    %c0_192 = arith.constant 0 : index
    %c0_193 = arith.constant 0 : index
    %302 = vector.load %arg10[%c0_192, %c0_193] : memref<8x32xf32, #tpu.memory_space<vmem>>, vector<8x32xf32>
    tpu.vector_store %arg10[%c0_192, %c0_193], %300 {strides = array<i32>} : memref<8x32xf32, #tpu.memory_space<vmem>>, vector<8x32xf32>,
    %c24_194 = arith.constant 24 : index
    %c0_195 = arith.constant 0 : index
    %303 = vector.load %arg9[%c24_194, %c0_195] : memref<64x32xf32, #tpu.memory_space<vmem>>, vector<8x32xf32>
    tpu.vector_store %arg9[%c24_194, %c0_195], %300 {strides = array<i32>} : memref<64x32xf32, #tpu.memory_space<vmem>>, vector<8x32xf32>,
    %c0_196 = arith.constant 0 : index
    %c0_197 = arith.constant 0 : index
    %304 = vector.load %arg10[%c0_196, %c0_197] : memref<8x32xf32, #tpu.memory_space<vmem>>, vector<8x32xf32>
    %c0_198 = arith.constant 0 : index
    %c0_199 = arith.constant 0 : index
    %305 = vector.load %arg11[%c0_198, %c0_199] : memref<8x32xf32, #tpu.memory_space<vmem>>, vector<8x32xf32>
    %c32_200 = arith.constant 32 : index
    %c0_201 = arith.constant 0 : index
    %306 = vector.load %arg8[%c32_200, %c0_201] : memref<64x128xf32, #tpu.memory_space<vmem>>, vector<8x128xf32>
    %cst_202 = arith.constant dense<0.000000e+00> : vector<8x128xf32>
    %307 = tpu.matmul %304, %211, %cst_202 {dimension_numbers = #tpu.dot_dimension_numbers<[1], [0], [0], [1], [0, 0, 1, 1], [], []>} : vector<8x32xf32>, vector<32x128xf32>, vector<8x128xf32> -> vector<8x128xf32>
    %308 = arith.addf %306, %307 : vector<8x128xf32>
    %309 = arith.negf %308 : vector<8x128xf32>
    %310 = math.exp %309 : vector<8x128xf32>
    %cst_203 = arith.constant 1.000000e+00 : f32
    %311 = vector.broadcast %cst_203 : f32 to vector<8x128xf32>
    %312 = arith.addf %311, %310 : vector<8x128xf32>
    %313 = arith.divf %311, %312 : vector<8x128xf32>
    %314 = math.tanh %308 : vector<8x128xf32>
    %315 = vector.extract_strided_slice %313 {offsets = [0, 0], sizes = [8, 32], strides = [1, 1]} : vector<8x128xf32> to vector<8x32xf32>
    %316 = vector.extract_strided_slice %313 {offsets = [0, 32], sizes = [8, 32], strides = [1, 1]} : vector<8x128xf32> to vector<8x32xf32>
    %317 = vector.extract_strided_slice %314 {offsets = [0, 64], sizes = [8, 32], strides = [1, 1]} : vector<8x128xf32> to vector<8x32xf32>
    %318 = vector.extract_strided_slice %313 {offsets = [0, 96], sizes = [8, 32], strides = [1, 1]} : vector<8x128xf32> to vector<8x32xf32>
    %319 = arith.mulf %316, %305 : vector<8x32xf32>
    %320 = arith.mulf %315, %317 : vector<8x32xf32>
    %321 = arith.addf %319, %320 : vector<8x32xf32>
    %322 = math.tanh %321 : vector<8x32xf32>
    %323 = arith.mulf %318, %322 : vector<8x32xf32>
    %c0_204 = arith.constant 0 : index
    %c0_205 = arith.constant 0 : index
    %324 = vector.load %arg11[%c0_204, %c0_205] : memref<8x32xf32, #tpu.memory_space<vmem>>, vector<8x32xf32>
    tpu.vector_store %arg11[%c0_204, %c0_205], %321 {strides = array<i32>} : memref<8x32xf32, #tpu.memory_space<vmem>>, vector<8x32xf32>,
    %c0_206 = arith.constant 0 : index
    %c0_207 = arith.constant 0 : index
    %325 = vector.load %arg10[%c0_206, %c0_207] : memref<8x32xf32, #tpu.memory_space<vmem>>, vector<8x32xf32>
    tpu.vector_store %arg10[%c0_206, %c0_207], %323 {strides = array<i32>} : memref<8x32xf32, #tpu.memory_space<vmem>>, vector<8x32xf32>,
    %c32_208 = arith.constant 32 : index
    %c0_209 = arith.constant 0 : index
    %326 = vector.load %arg9[%c32_208, %c0_209] : memref<64x32xf32, #tpu.memory_space<vmem>>, vector<8x32xf32>
    tpu.vector_store %arg9[%c32_208, %c0_209], %323 {strides = array<i32>} : memref<64x32xf32, #tpu.memory_space<vmem>>, vector<8x32xf32>,
    %c0_210 = arith.constant 0 : index
    %c0_211 = arith.constant 0 : index
    %327 = vector.load %arg10[%c0_210, %c0_211] : memref<8x32xf32, #tpu.memory_space<vmem>>, vector<8x32xf32>
    %c0_212 = arith.constant 0 : index
    %c0_213 = arith.constant 0 : index
    %328 = vector.load %arg11[%c0_212, %c0_213] : memref<8x32xf32, #tpu.memory_space<vmem>>, vector<8x32xf32>
    %c40_214 = arith.constant 40 : index
    %c0_215 = arith.constant 0 : index
    %329 = vector.load %arg8[%c40_214, %c0_215] : memref<64x128xf32, #tpu.memory_space<vmem>>, vector<8x128xf32>
    %cst_216 = arith.constant dense<0.000000e+00> : vector<8x128xf32>
    %330 = tpu.matmul %327, %211, %cst_216 {dimension_numbers = #tpu.dot_dimension_numbers<[1], [0], [0], [1], [0, 0, 1, 1], [], []>} : vector<8x32xf32>, vector<32x128xf32>, vector<8x128xf32> -> vector<8x128xf32>
    %331 = arith.addf %329, %330 : vector<8x128xf32>
    %332 = arith.negf %331 : vector<8x128xf32>
    %333 = math.exp %332 : vector<8x128xf32>
    %cst_217 = arith.constant 1.000000e+00 : f32
    %334 = vector.broadcast %cst_217 : f32 to vector<8x128xf32>
    %335 = arith.addf %334, %333 : vector<8x128xf32>
    %336 = arith.divf %334, %335 : vector<8x128xf32>
    %337 = math.tanh %331 : vector<8x128xf32>
    %338 = vector.extract_strided_slice %336 {offsets = [0, 0], sizes = [8, 32], strides = [1, 1]} : vector<8x128xf32> to vector<8x32xf32>
    %339 = vector.extract_strided_slice %336 {offsets = [0, 32], sizes = [8, 32], strides = [1, 1]} : vector<8x128xf32> to vector<8x32xf32>
    %340 = vector.extract_strided_slice %337 {offsets = [0, 64], sizes = [8, 32], strides = [1, 1]} : vector<8x128xf32> to vector<8x32xf32>
    %341 = vector.extract_strided_slice %336 {offsets = [0, 96], sizes = [8, 32], strides = [1, 1]} : vector<8x128xf32> to vector<8x32xf32>
    %342 = arith.mulf %339, %328 : vector<8x32xf32>
    %343 = arith.mulf %338, %340 : vector<8x32xf32>
    %344 = arith.addf %342, %343 : vector<8x32xf32>
    %345 = math.tanh %344 : vector<8x32xf32>
    %346 = arith.mulf %341, %345 : vector<8x32xf32>
    %c0_218 = arith.constant 0 : index
    %c0_219 = arith.constant 0 : index
    %347 = vector.load %arg11[%c0_218, %c0_219] : memref<8x32xf32, #tpu.memory_space<vmem>>, vector<8x32xf32>
    tpu.vector_store %arg11[%c0_218, %c0_219], %344 {strides = array<i32>} : memref<8x32xf32, #tpu.memory_space<vmem>>, vector<8x32xf32>,
    %c0_220 = arith.constant 0 : index
    %c0_221 = arith.constant 0 : index
    %348 = vector.load %arg10[%c0_220, %c0_221] : memref<8x32xf32, #tpu.memory_space<vmem>>, vector<8x32xf32>
    tpu.vector_store %arg10[%c0_220, %c0_221], %346 {strides = array<i32>} : memref<8x32xf32, #tpu.memory_space<vmem>>, vector<8x32xf32>,
    %c40_222 = arith.constant 40 : index
    %c0_223 = arith.constant 0 : index
    %349 = vector.load %arg9[%c40_222, %c0_223] : memref<64x32xf32, #tpu.memory_space<vmem>>, vector<8x32xf32>
    tpu.vector_store %arg9[%c40_222, %c0_223], %346 {strides = array<i32>} : memref<64x32xf32, #tpu.memory_space<vmem>>, vector<8x32xf32>,
    %c0_224 = arith.constant 0 : index
    %c0_225 = arith.constant 0 : index
    %350 = vector.load %arg10[%c0_224, %c0_225] : memref<8x32xf32, #tpu.memory_space<vmem>>, vector<8x32xf32>
    %c0_226 = arith.constant 0 : index
    %c0_227 = arith.constant 0 : index
    %351 = vector.load %arg11[%c0_226, %c0_227] : memref<8x32xf32, #tpu.memory_space<vmem>>, vector<8x32xf32>
    %c48_228 = arith.constant 48 : index
    %c0_229 = arith.constant 0 : index
    %352 = vector.load %arg8[%c48_228, %c0_229] : memref<64x128xf32, #tpu.memory_space<vmem>>, vector<8x128xf32>
    %cst_230 = arith.constant dense<0.000000e+00> : vector<8x128xf32>
    %353 = tpu.matmul %350, %211, %cst_230 {dimension_numbers = #tpu.dot_dimension_numbers<[1], [0], [0], [1], [0, 0, 1, 1], [], []>} : vector<8x32xf32>, vector<32x128xf32>, vector<8x128xf32> -> vector<8x128xf32>
    %354 = arith.addf %352, %353 : vector<8x128xf32>
    %355 = arith.negf %354 : vector<8x128xf32>
    %356 = math.exp %355 : vector<8x128xf32>
    %cst_231 = arith.constant 1.000000e+00 : f32
    %357 = vector.broadcast %cst_231 : f32 to vector<8x128xf32>
    %358 = arith.addf %357, %356 : vector<8x128xf32>
    %359 = arith.divf %357, %358 : vector<8x128xf32>
    %360 = math.tanh %354 : vector<8x128xf32>
    %361 = vector.extract_strided_slice %359 {offsets = [0, 0], sizes = [8, 32], strides = [1, 1]} : vector<8x128xf32> to vector<8x32xf32>
    %362 = vector.extract_strided_slice %359 {offsets = [0, 32], sizes = [8, 32], strides = [1, 1]} : vector<8x128xf32> to vector<8x32xf32>
    %363 = vector.extract_strided_slice %360 {offsets = [0, 64], sizes = [8, 32], strides = [1, 1]} : vector<8x128xf32> to vector<8x32xf32>
    %364 = vector.extract_strided_slice %359 {offsets = [0, 96], sizes = [8, 32], strides = [1, 1]} : vector<8x128xf32> to vector<8x32xf32>
    %365 = arith.mulf %362, %351 : vector<8x32xf32>
    %366 = arith.mulf %361, %363 : vector<8x32xf32>
    %367 = arith.addf %365, %366 : vector<8x32xf32>
    %368 = math.tanh %367 : vector<8x32xf32>
    %369 = arith.mulf %364, %368 : vector<8x32xf32>
    %c0_232 = arith.constant 0 : index
    %c0_233 = arith.constant 0 : index
    %370 = vector.load %arg11[%c0_232, %c0_233] : memref<8x32xf32, #tpu.memory_space<vmem>>, vector<8x32xf32>
    tpu.vector_store %arg11[%c0_232, %c0_233], %367 {strides = array<i32>} : memref<8x32xf32, #tpu.memory_space<vmem>>, vector<8x32xf32>,
    %c0_234 = arith.constant 0 : index
    %c0_235 = arith.constant 0 : index
    %371 = vector.load %arg10[%c0_234, %c0_235] : memref<8x32xf32, #tpu.memory_space<vmem>>, vector<8x32xf32>
    tpu.vector_store %arg10[%c0_234, %c0_235], %369 {strides = array<i32>} : memref<8x32xf32, #tpu.memory_space<vmem>>, vector<8x32xf32>,
    %c48_236 = arith.constant 48 : index
    %c0_237 = arith.constant 0 : index
    %372 = vector.load %arg9[%c48_236, %c0_237] : memref<64x32xf32, #tpu.memory_space<vmem>>, vector<8x32xf32>
    tpu.vector_store %arg9[%c48_236, %c0_237], %369 {strides = array<i32>} : memref<64x32xf32, #tpu.memory_space<vmem>>, vector<8x32xf32>,
    %c0_238 = arith.constant 0 : index
    %c0_239 = arith.constant 0 : index
    %373 = vector.load %arg10[%c0_238, %c0_239] : memref<8x32xf32, #tpu.memory_space<vmem>>, vector<8x32xf32>
    %c0_240 = arith.constant 0 : index
    %c0_241 = arith.constant 0 : index
    %374 = vector.load %arg11[%c0_240, %c0_241] : memref<8x32xf32, #tpu.memory_space<vmem>>, vector<8x32xf32>
    %c56_242 = arith.constant 56 : index
    %c0_243 = arith.constant 0 : index
    %375 = vector.load %arg8[%c56_242, %c0_243] : memref<64x128xf32, #tpu.memory_space<vmem>>, vector<8x128xf32>
    %cst_244 = arith.constant dense<0.000000e+00> : vector<8x128xf32>
    %376 = tpu.matmul %373, %211, %cst_244 {dimension_numbers = #tpu.dot_dimension_numbers<[1], [0], [0], [1], [0, 0, 1, 1], [], []>} : vector<8x32xf32>, vector<32x128xf32>, vector<8x128xf32> -> vector<8x128xf32>
    %377 = arith.addf %375, %376 : vector<8x128xf32>
    %378 = arith.negf %377 : vector<8x128xf32>
    %379 = math.exp %378 : vector<8x128xf32>
    %cst_245 = arith.constant 1.000000e+00 : f32
    %380 = vector.broadcast %cst_245 : f32 to vector<8x128xf32>
    %381 = arith.addf %380, %379 : vector<8x128xf32>
    %382 = arith.divf %380, %381 : vector<8x128xf32>
    %383 = math.tanh %377 : vector<8x128xf32>
    %384 = vector.extract_strided_slice %382 {offsets = [0, 0], sizes = [8, 32], strides = [1, 1]} : vector<8x128xf32> to vector<8x32xf32>
    %385 = vector.extract_strided_slice %382 {offsets = [0, 32], sizes = [8, 32], strides = [1, 1]} : vector<8x128xf32> to vector<8x32xf32>
    %386 = vector.extract_strided_slice %383 {offsets = [0, 64], sizes = [8, 32], strides = [1, 1]} : vector<8x128xf32> to vector<8x32xf32>
    %387 = vector.extract_strided_slice %382 {offsets = [0, 96], sizes = [8, 32], strides = [1, 1]} : vector<8x128xf32> to vector<8x32xf32>
    %388 = arith.mulf %385, %374 : vector<8x32xf32>
    %389 = arith.mulf %384, %386 : vector<8x32xf32>
    %390 = arith.addf %388, %389 : vector<8x32xf32>
    %391 = math.tanh %390 : vector<8x32xf32>
    %392 = arith.mulf %387, %391 : vector<8x32xf32>
    %c0_246 = arith.constant 0 : index
    %c0_247 = arith.constant 0 : index
    %393 = vector.load %arg11[%c0_246, %c0_247] : memref<8x32xf32, #tpu.memory_space<vmem>>, vector<8x32xf32>
    tpu.vector_store %arg11[%c0_246, %c0_247], %390 {strides = array<i32>} : memref<8x32xf32, #tpu.memory_space<vmem>>, vector<8x32xf32>,
    %c0_248 = arith.constant 0 : index
    %c0_249 = arith.constant 0 : index
    %394 = vector.load %arg10[%c0_248, %c0_249] : memref<8x32xf32, #tpu.memory_space<vmem>>, vector<8x32xf32>
    tpu.vector_store %arg10[%c0_248, %c0_249], %392 {strides = array<i32>} : memref<8x32xf32, #tpu.memory_space<vmem>>, vector<8x32xf32>,
    %c56_250 = arith.constant 56 : index
    %c0_251 = arith.constant 0 : index
    %395 = vector.load %arg9[%c56_250, %c0_251] : memref<64x32xf32, #tpu.memory_space<vmem>>, vector<8x32xf32>
    tpu.vector_store %arg9[%c56_250, %c0_251], %392 {strides = array<i32>} : memref<64x32xf32, #tpu.memory_space<vmem>>, vector<8x32xf32>,
    %c0_252 = arith.constant 0 : index
    %c0_253 = arith.constant 0 : index
    %396 = vector.load %arg9[%c0_252, %c0_253] : memref<64x32xf32, #tpu.memory_space<vmem>>, vector<64x32xf32>
    %c0_254 = arith.constant 0 : index
    %c0_255 = arith.constant 0 : index
    %397 = vector.load %arg7[%c0_254, %c0_255] : memref<64x32xf32, #tpu.memory_space<vmem>>, vector<64x32xf32>
    tpu.vector_store %arg7[%c0_254, %c0_255], %396 {strides = array<i32>} : memref<64x32xf32, #tpu.memory_space<vmem>>, vector<64x32xf32>,
    return
  }
  func.func @transform_0(%arg0: i32) -> (i32, i32) {
    %c0_i32 = arith.constant 0 : i32
    %c0_i32_0 = arith.constant 0 : i32
    %c0_i32_1 = arith.constant 0 : i32
    return %c0_i32, %c0_i32_0 : i32, i32
  }
  func.func @transform_1(%arg0: i32) -> (i32, i32) {
    %c0_i32 = arith.constant 0 : i32
    %c0_i32_0 = arith.constant 0 : i32
    %c0_i32_1 = arith.constant 0 : i32
    return %c0_i32, %c0_i32_0 : i32, i32
  }
  func.func @transform_2(%arg0: i32) -> (i32, i32) {
    %c0_i32 = arith.constant 0 : i32
    %c0_i32_0 = arith.constant 0 : i32
    %c0_i32_1 = arith.constant 0 : i32
    return %c0_i32, %c0_i32_0 : i32, i32
  }
  func.func @transform_3(%arg0: i32) -> (i32, i32, i32) {
    %c0_i32 = arith.constant 0 : i32
    %c0_i32_0 = arith.constant 0 : i32
    %c0_i32_1 = arith.constant 0 : i32
    %c0_i32_2 = arith.constant 0 : i32
    return %c0_i32, %c0_i32_0, %c0_i32_1 : i32, i32, i32
  }
  func.func @transform_4(%arg0: i32) -> (i32, i32, i32) {
    %c0_i32 = arith.constant 0 : i32
    %c0_i32_0 = arith.constant 0 : i32
    %c0_i32_1 = arith.constant 0 : i32
    %c0_i32_2 = arith.constant 0 : i32
    return %c0_i32, %c0_i32_0, %c0_i32_1 : i32, i32, i32
  }
  func.func @transform_5(%arg0: i32) -> (i32, i32, i32) {
    %c0_i32 = arith.constant 0 : i32
    %c0_i32_0 = arith.constant 0 : i32
    %c0_i32_1 = arith.constant 0 : i32
    %c0_i32_2 = arith.constant 0 : i32
    return %c0_i32, %c0_i32_0, %c0_i32_1 : i32, i32, i32
  }
  func.func @transform_6(%arg0: i32) -> (i32, i32) {
    %c0_i32 = arith.constant 0 : i32
    %c0_i32_0 = arith.constant 0 : i32
    %c0_i32_1 = arith.constant 0 : i32
    return %c0_i32, %c0_i32_0 : i32, i32
  }
}

</mosaic_0001>

<llo_original>
// kernel: vanilla_lstm_forward.1
$region0: #{vanilla_lstm_forward.1}
  #allocation0 [shape = 'u32[]', space=smem, size = 0x4, offset = 0x4, fixed_abs, tag = 'smem constant byte address 0x4 - core index']
  #allocation1 [shape = 'u32[72,128]{1,0:T(1,128)}', space=vmem, size = 0x9000, scoped, tag = 'internal scratch']
  #allocation2 [shape = 'f32[64,128]{1,0:T(8,128)}', space=vmem, size = 0x8000, scoped, tag = 'scratch operand']
  #allocation3 [shape = 'f32[64,32]{1,0:T(8,128)}', space=vmem, size = 0x8000, scoped, tag = 'scratch operand']
  #allocation4 [shape = 'f32[8,32]{1,0:T(8,128)}', space=vmem, size = 0x1000, scoped, tag = 'scratch operand']
  #allocation5 [shape = 'f32[8,32]{1,0:T(8,128)}', space=vmem, size = 0x1000, scoped, tag = 'scratch operand']
  %s0 = inlined_call_operand.vmem [shape: f32[64,16], index: 0, kind: input, shape index: {}]
  %s1 = inlined_call_operand.vmem [shape: f32[16,128], index: 1, kind: input, shape index: {}]
  %s2 = inlined_call_operand.vmem [shape: f32[1,128], index: 2, kind: input, shape index: {}]
  %s3 = inlined_call_operand.vmem [shape: f32[1,32,128], index: 3, kind: input, shape index: {}]
  %s4 = inlined_call_operand.vmem [shape: f32[2,32,128], index: 4, kind: input, shape index: {}]
  %s5 = inlined_call_operand.vmem [shape: f32[1,1,128], index: 5, kind: input, shape index: {}]
  %s6 = inlined_call_operand.vmem [shape: f32[64,32], index: 6, kind: output, shape index: {}]
  %s7 = sld [smem:[#allocation0]]
  $region34: #{vanilla_lstm_forward.1} parent=0
    _
  %s9 = ssub.s32 1, %s7
  %s10 = scalar_select 0, %s9, %s7
  // Predicated region
  $region2: #{vanilla_lstm_forward.1} parent=0 // pred_check
    _
  $region3: #{vanilla_lstm_forward.1} parent=0 // pred_check_branch
    %12 = sbr.rel (0) target = $region5
  $region4: #{vanilla_lstm_forward.1} parent=0 // pred_region
    _
  $region5: #{vanilla_lstm_forward.1} parent=0 // pred_fallthru
    _
  // Predicated region
  $region6: #{vanilla_lstm_forward.1} parent=0 // pred_check
    _
  $region7: #{vanilla_lstm_forward.1} parent=0 // pred_check_branch
    %14 = sbr.rel (0) target = $region9
  $region8: #{vanilla_lstm_forward.1} parent=0 // pred_region
    _
  $region9: #{vanilla_lstm_forward.1} parent=0 // pred_fallthru
    _
  // Predicated region
  $region10: #{vanilla_lstm_forward.1} parent=0 // pred_check
    _
  $region11: #{vanilla_lstm_forward.1} parent=0 // pred_check_branch
    %16 = sbr.rel (0) target = $region13
  $region12: #{vanilla_lstm_forward.1} parent=0 // pred_region
    _
  $region13: #{vanilla_lstm_forward.1} parent=0 // pred_fallthru
    _
  // Predicated region
  $region14: #{vanilla_lstm_forward.1} parent=0 // pred_check
    _
  $region15: #{vanilla_lstm_forward.1} parent=0 // pred_check_branch
    %18 = sbr.rel (0) target = $region17
  $region16: #{vanilla_lstm_forward.1} parent=0 // pred_region
    _
  $region17: #{vanilla_lstm_forward.1} parent=0 // pred_fallthru
    _
  // Predicated region
  $region18: #{vanilla_lstm_forward.1} parent=0 // pred_check
    _
  $region19: #{vanilla_lstm_forward.1} parent=0 // pred_check_branch
    %20 = sbr.rel (0) target = $region21
  $region20: #{vanilla_lstm_forward.1} parent=0 // pred_region
    _
  $region21: #{vanilla_lstm_forward.1} parent=0 // pred_fallthru
    _
  // Predicated region
  $region22: #{vanilla_lstm_forward.1} parent=0 // pred_check
    _
  $region23: #{vanilla_lstm_forward.1} parent=0 // pred_check_branch
    %22 = sbr.rel (0) target = $region25
  $region24: #{vanilla_lstm_forward.1} parent=0 // pred_region
    _
  $region25: #{vanilla_lstm_forward.1} parent=0 // pred_fallthru
    _
  %v23 = vld [vmem:[%s0] sm:$0xff]
  %v24 = vld [vmem:[%s0 + $0x8] sm:$0xff]
  %v25 = vld [vmem:[%s0 + $0x10] sm:$0xff]
  %v26 = vld [vmem:[%s0 + $0x18] sm:$0xff]
  %v27 = vld [vmem:[%s0 + $0x20] sm:$0xff]
  %v28 = vld [vmem:[%s0 + $0x28] sm:$0xff]
  %v29 = vld [vmem:[%s0 + $0x30] sm:$0xff]
  %v30 = vld [vmem:[%s0 + $0x38] sm:$0xff]
  %v31 = vld [vmem:[%s1] sm:$0xff]
  %v32 = vld [vmem:[%s1 + $0x8] sm:$0xff]
  %v33 = vld [vmem:[%s2] sm:$0x1]
  %v35 = vperm.slane %v33, 0
  %vm37 = vcmask 130048
  %v39 = vsel %vm37, %v23, 0
  %v42 = vsel %vm37, %v24, 0
  %v45 = vsel %vm37, %v25, 0
  %v48 = vsel %vm37, %v26, 0
  %v51 = vsel %vm37, %v27, 0
  %v54 = vsel %vm37, %v28, 0
  %v57 = vsel %vm37, %v29, 0
  %v60 = vsel %vm37, %v30, 0
  %62 = vmatpush.msra.mxu0 0.0
  %63 = vmatpush.msra.mxu0 0.0
  %64 = vmatpush.msra.mxu0 0.0
  %65 = vmatpush.msra.mxu0 0.0
  %66 = vmatpush.msra.mxu0 0.0
  %67 = vmatpush.msra.mxu0 0.0
  %68 = vmatpush.msra.mxu0 0.0
  %69 = vmatpush.msra.mxu0 0.0
  %70 = vmatpush.msra.mxu0 0.0
  %71 = vmatpush.msra.mxu0 0.0
  %72 = vmatpush.msra.mxu0 0.0
  %73 = vmatpush.msra.mxu0 0.0
  %74 = vmatpush.msra.mxu0 0.0
  %75 = vmatpush.msra.mxu0 0.0
  %76 = vmatpush.msra.mxu0 %v32
  %77 = vmatpush.msra.mxu0 %v31
  %78 = vmatmul.f32.gmra.mxu0 %v39
  %v79 = vpop.f32.mrf.mxu0
  %v80 = vadd.f32 %v35, %v79
  %81 = vmatmul.f32.gmra.mxu0 %v42
  %v82 = vpop.f32.mrf.mxu0
  %v83 = vadd.f32 %v35, %v82
  %84 = vmatmul.f32.gmra.mxu0 %v45
  %v85 = vpop.f32.mrf.mxu0
  %v86 = vadd.f32 %v35, %v85
  %87 = vmatmul.f32.gmra.mxu0 %v48
  %v88 = vpop.f32.mrf.mxu0
  %v89 = vadd.f32 %v35, %v88
  %90 = vmatmul.f32.gmra.mxu0 %v51
  %v91 = vpop.f32.mrf.mxu0
  %v92 = vadd.f32 %v35, %v91
  %93 = vmatmul.f32.gmra.mxu0 %v54
  %v94 = vpop.f32.mrf.mxu0
  %v95 = vadd.f32 %v35, %v94
  %96 = vmatmul.f32.gmra.mxu0 %v57
  %v97 = vpop.f32.mrf.mxu0
  %v98 = vadd.f32 %v35, %v97
  %99 = vmatmul.f32.gmra.mxu0 %v60
  %v100 = vpop.f32.mrf.mxu0
  %v101 = vadd.f32 %v35, %v100
  %102 = vdwg.mxu0
  %103 = vst [vmem:[#allocation2] sm:$0xff] %v80
  %104 = vst [vmem:[#allocation2 + $0x8] sm:$0xff] %v83
  %105 = vst [vmem:[#allocation2 + $0x10] sm:$0xff] %v86
  %106 = vst [vmem:[#allocation2 + $0x18] sm:$0xff] %v89
  %107 = vst [vmem:[#allocation2 + $0x20] sm:$0xff] %v92
  %108 = vst [vmem:[#allocation2 + $0x28] sm:$0xff] %v95
  %109 = vst [vmem:[#allocation2 + $0x30] sm:$0xff] %v98
  %110 = vst [vmem:[#allocation2 + $0x38] sm:$0xff] %v101
  %vm111 = vcmask 261120
  %112 = vst.msk [vmem:[#allocation4] sm:$0xff] %vm111, 0.0
  %113 = vst.msk [vmem:[#allocation5] sm:$0xff] %vm111, 0.0
  %v114 = vld [vmem:[%s4] sm:$0xff]
  %v115 = vld [vmem:[%s4 + $0x8] sm:$0xff]
  %v116 = vld [vmem:[%s4 + $0x10] sm:$0xff]
  %v117 = vld [vmem:[%s4 + $0x18] sm:$0xff]
  %v118 = vld [vmem:[#allocation4] sm:$0xff]
  %v119 = vld [vmem:[#allocation5] sm:$0xff]
  %v120 = vld [vmem:[#allocation2] sm:$0xff]
  %v122 = vsel %vm111, %v118, 0
  %124 = vmatpush.msra.mxu0 0.0
  %125 = vmatpush.msra.mxu0 0.0
  %126 = vmatpush.msra.mxu0 0.0
  %127 = vmatpush.msra.mxu0 0.0
  %128 = vmatpush.msra.mxu0 0.0
  %129 = vmatpush.msra.mxu0 0.0
  %130 = vmatpush.msra.mxu0 0.0
  %131 = vmatpush.msra.mxu0 0.0
  %132 = vmatpush.msra.mxu0 0.0
  %133 = vmatpush.msra.mxu0 0.0
  %134 = vmatpush.msra.mxu0 0.0
  %135 = vmatpush.msra.mxu0 0.0
  %136 = vmatpush.msra.mxu0 %v117
  %137 = vmatpush.msra.mxu0 %v116
  %138 = vmatpush.msra.mxu0 %v115
  %139 = vmatpush.msra.mxu0 %v114
  %140 = vmatmul.f32.gmra.mxu0 %v122
  %v141 = vpop.f32.mrf.mxu0
  %v142 = vadd.f32 0.0, %v141
  %143 = vdwg.mxu0
  %v144 = vadd.f32 %v120, %v142
  %v145 = vxor.u32 %v144, 2147483648
  %v146 = vmul.f32 %v145, 1.442695
  %v147 = vpow.pop %v146
  %v148 = vadd.f32 %v147, 1.0
  %v149 = vrcp.pop %v148
  %v150 = vmul.f32 %v148, %v149
  %v151 = vsub.f32 1.0, %v150
  %v152 = vmul.f32 %v149, %v151
  %v153 = vadd.f32 %v149, %v152
  %vm154 = vweird.f32 %v148
  %vm155 = vweird.f32 %v149
  %vm156 = vmor %vm154, %vm155
  %v157 = vsel %vm156, %v149, %v153
  %v158 = vand.u32 2147483647, %v148
  %vm159 = vcmp.eq.f32.partialorder %v158, 8.507059e+37
  %v160 = vand.u32 %v148, 2147483648
  %v161 = vor.u32 1.1754944e-38, %v160
  %v162 = vsel %vm159, %v161, %v157
  %v163 = vmul.f32 1.0, %v162
  %v164 = vtanh.pop %v144
  %166 = vrot.lane.b32.xlu0 %v119, 32
  %v167 = vpop.permute.xlu0 %166
  %v169 = vmul.f32 %v163, %v167
  %171 = vrot.lane.b32.xlu0 %v164, 64
  %v172 = vpop.permute.xlu0 %171
  %v174 = vmul.f32 %v163, %v172
  %176 = vrot.lane.b32.xlu0 %v174, 32
  %v177 = vpop.permute.xlu0 %176
  %v179 = vadd.f32 %v169, %v177
  %v180 = vtanh.pop %v179
  %182 = vrot.lane.b32.xlu0 %v180, 64
  %v183 = vpop.permute.xlu0 %182
  %v185 = vmul.f32 %v163, %v183
  %187 = vrot.lane.b32.xlu0 %v179, 96
  %v188 = vpop.permute.xlu0 %187
  %190 = vst.msk [vmem:[#allocation5] sm:$0xff] %vm111, %v188
  %192 = vrot.lane.b32.xlu0 %v185, 32
  %v193 = vpop.permute.xlu0 %192
  %195 = vst.msk [vmem:[#allocation4] sm:$0xff] %vm111, %v193
  %196 = vst.msk [vmem:[#allocation3] sm:$0xff] %vm111, %v193
  %v197 = vld [vmem:[#allocation4] sm:$0xff]
  %v198 = vld [vmem:[#allocation5] sm:$0xff]
  %v199 = vld [vmem:[#allocation2 + $0x8] sm:$0xff]
  %v201 = vsel %vm111, %v197, 0
  %203 = vmatpush.msra.mxu0 0.0
  %204 = vmatpush.msra.mxu0 0.0
  %205 = vmatpush.msra.mxu0 0.0
  %206 = vmatpush.msra.mxu0 0.0
  %207 = vmatpush.msra.mxu0 0.0
  %208 = vmatpush.msra.mxu0 0.0
  %209 = vmatpush.msra.mxu0 0.0
  %210 = vmatpush.msra.mxu0 0.0
  %211 = vmatpush.msra.mxu0 0.0
  %212 = vmatpush.msra.mxu0 0.0
  %213 = vmatpush.msra.mxu0 0.0
  %214 = vmatpush.msra.mxu0 0.0
  %215 = vmatpush.msra.mxu0 %v117
  %216 = vmatpush.msra.mxu0 %v116
  %217 = vmatpush.msra.mxu0 %v115
  %218 = vmatpush.msra.mxu0 %v114
  %219 = vmatmul.f32.gmra.mxu0 %v201
  %v220 = vpop.f32.mrf.mxu0
  %v221 = vadd.f32 0.0, %v220
  %222 = vdwg.mxu0
  %v223 = vadd.f32 %v199, %v221
  %v224 = vxor.u32 %v223, 2147483648
  %v225 = vmul.f32 %v224, 1.442695
  %v226 = vpow.pop %v225
  %v227 = vadd.f32 %v226, 1.0
  %v228 = vrcp.pop %v227
  %v229 = vmul.f32 %v227, %v228
  %v230 = vsub.f32 1.0, %v229
  %v231 = vmul.f32 %v228, %v230
  %v232 = vadd.f32 %v228, %v231
  %vm233 = vweird.f32 %v227
  %vm234 = vweird.f32 %v228
  %vm235 = vmor %vm233, %vm234
  %v236 = vsel %vm235, %v228, %v232
  %v237 = vand.u32 2147483647, %v227
  %vm238 = vcmp.eq.f32.partialorder %v237, 8.507059e+37
  %v239 = vand.u32 %v227, 2147483648
  %v240 = vor.u32 1.1754944e-38, %v239
  %v241 = vsel %vm238, %v240, %v236
  %v242 = vmul.f32 1.0, %v241
  %v243 = vtanh.pop %v223
  %245 = vrot.lane.b32.xlu0 %v198, 32
  %v246 = vpop.permute.xlu0 %245
  %v248 = vmul.f32 %v242, %v246
  %250 = vrot.lane.b32.xlu0 %v243, 64
  %v251 = vpop.permute.xlu0 %250
  %v253 = vmul.f32 %v242, %v251
  %255 = vrot.lane.b32.xlu0 %v253, 32
  %v256 = vpop.permute.xlu0 %255
  %v258 = vadd.f32 %v248, %v256
  %v259 = vtanh.pop %v258
  %261 = vrot.lane.b32.xlu0 %v259, 64
  %v262 = vpop.permute.xlu0 %261
  %v264 = vmul.f32 %v242, %v262
  %266 = vrot.lane.b32.xlu0 %v258, 96
  %v267 = vpop.permute.xlu0 %266
  %269 = vst.msk [vmem:[#allocation5] sm:$0xff] %vm111, %v267
  %271 = vrot.lane.b32.xlu0 %v264, 32
  %v272 = vpop.permute.xlu0 %271
  %274 = vst.msk [vmem:[#allocation4] sm:$0xff] %vm111, %v272
  %275 = vst.msk [vmem:[#allocation3 + $0x8] sm:$0xff] %vm111, %v272
  %v276 = vld [vmem:[#allocation4] sm:$0xff]
  %v277 = vld [vmem:[#allocation5] sm:$0xff]
  %v278 = vld [vmem:[#allocation2 + $0x10] sm:$0xff]
  %v280 = vsel %vm111, %v276, 0
  %282 = vmatpush.msra.mxu0 0.0
  %283 = vmatpush.msra.mxu0 0.0
  %284 = vmatpush.msra.mxu0 0.0
  %285 = vmatpush.msra.mxu0 0.0
  %286 = vmatpush.msra.mxu0 0.0
  %287 = vmatpush.msra.mxu0 0.0
  %288 = vmatpush.msra.mxu0 0.0
  %289 = vmatpush.msra.mxu0 0.0
  %290 = vmatpush.msra.mxu0 0.0
  %291 = vmatpush.msra.mxu0 0.0
  %292 = vmatpush.msra.mxu0 0.0
  %293 = vmatpush.msra.mxu0 0.0
  %294 = vmatpush.msra.mxu0 %v117
  %295 = vmatpush.msra.mxu0 %v116
  %296 = vmatpush.msra.mxu0 %v115
  %297 = vmatpush.msra.mxu0 %v114
  %298 = vmatmul.f32.gmra.mxu0 %v280
  %v299 = vpop.f32.mrf.mxu0
  %v300 = vadd.f32 0.0, %v299
  %301 = vdwg.mxu0
  %v302 = vadd.f32 %v278, %v300
  %v303 = vxor.u32 %v302, 2147483648
  %v304 = vmul.f32 %v303, 1.442695
  %v305 = vpow.pop %v304
  %v306 = vadd.f32 %v305, 1.0
  %v307 = vrcp.pop %v306
  %v308 = vmul.f32 %v306, %v307
  %v309 = vsub.f32 1.0, %v308
  %v310 = vmul.f32 %v307, %v309
  %v311 = vadd.f32 %v307, %v310
  %vm312 = vweird.f32 %v306
  %vm313 = vweird.f32 %v307
  %vm314 = vmor %vm312, %vm313
  %v315 = vsel %vm314, %v307, %v311
  %v316 = vand.u32 2147483647, %v306
  %vm317 = vcmp.eq.f32.partialorder %v316, 8.507059e+37
  %v318 = vand.u32 %v306, 2147483648
  %v319 = vor.u32 1.1754944e-38, %v318
  %v320 = vsel %vm317, %v319, %v315
  %v321 = vmul.f32 1.0, %v320
  %v322 = vtanh.pop %v302
  %324 = vrot.lane.b32.xlu0 %v277, 32
  %v325 = vpop.permute.xlu0 %324
  %v327 = vmul.f32 %v321, %v325
  %329 = vrot.lane.b32.xlu0 %v322, 64
  %v330 = vpop.permute.xlu0 %329
  %v332 = vmul.f32 %v321, %v330
  %334 = vrot.lane.b32.xlu0 %v332, 32
  %v335 = vpop.permute.xlu0 %334
  %v337 = vadd.f32 %v327, %v335
  %v338 = vtanh.pop %v337
  %340 = vrot.lane.b32.xlu0 %v338, 64
  %v341 = vpop.permute.xlu0 %340
  %v343 = vmul.f32 %v321, %v341
  %345 = vrot.lane.b32.xlu0 %v337, 96
  %v346 = vpop.permute.xlu0 %345
  %348 = vst.msk [vmem:[#allocation5] sm:$0xff] %vm111, %v346
  %350 = vrot.lane.b32.xlu0 %v343, 32
  %v351 = vpop.permute.xlu0 %350
  %353 = vst.msk [vmem:[#allocation4] sm:$0xff] %vm111, %v351
  %354 = vst.msk [vmem:[#allocation3 + $0x10] sm:$0xff] %vm111, %v351
  %v355 = vld [vmem:[#allocation4] sm:$0xff]
  %v356 = vld [vmem:[#allocation5] sm:$0xff]
  %v357 = vld [vmem:[#allocation2 + $0x18] sm:$0xff]
  %v359 = vsel %vm111, %v355, 0
  %361 = vmatpush.msra.mxu0 0.0
  %362 = vmatpush.msra.mxu0 0.0
  %363 = vmatpush.msra.mxu0 0.0
  %364 = vmatpush.msra.mxu0 0.0
  %365 = vmatpush.msra.mxu0 0.0
  %366 = vmatpush.msra.mxu0 0.0
  %367 = vmatpush.msra.mxu0 0.0
  %368 = vmatpush.msra.mxu0 0.0
  %369 = vmatpush.msra.mxu0 0.0
  %370 = vmatpush.msra.mxu0 0.0
  %371 = vmatpush.msra.mxu0 0.0
  %372 = vmatpush.msra.mxu0 0.0
  %373 = vmatpush.msra.mxu0 %v117
  %374 = vmatpush.msra.mxu0 %v116
  %375 = vmatpush.msra.mxu0 %v115
  %376 = vmatpush.msra.mxu0 %v114
  %377 = vmatmul.f32.gmra.mxu0 %v359
  %v378 = vpop.f32.mrf.mxu0
  %v379 = vadd.f32 0.0, %v378
  %380 = vdwg.mxu0
  %v381 = vadd.f32 %v357, %v379
  %v382 = vxor.u32 %v381, 2147483648
  %v383 = vmul.f32 %v382, 1.442695
  %v384 = vpow.pop %v383
  %v385 = vadd.f32 %v384, 1.0
  %v386 = vrcp.pop %v385
  %v387 = vmul.f32 %v385, %v386
  %v388 = vsub.f32 1.0, %v387
  %v389 = vmul.f32 %v386, %v388
  %v390 = vadd.f32 %v386, %v389
  %vm391 = vweird.f32 %v385
  %vm392 = vweird.f32 %v386
  %vm393 = vmor %vm391, %vm392
  %v394 = vsel %vm393, %v386, %v390
  %v395 = vand.u32 2147483647, %v385
  %vm396 = vcmp.eq.f32.partialorder %v395, 8.507059e+37
  %v397 = vand.u32 %v385, 2147483648
  %v398 = vor.u32 1.1754944e-38, %v397
  %v399 = vsel %vm396, %v398, %v394
  %v400 = vmul.f32 1.0, %v399
  %v401 = vtanh.pop %v381
  %403 = vrot.lane.b32.xlu0 %v356, 32
  %v404 = vpop.permute.xlu0 %403
  %v406 = vmul.f32 %v400, %v404
  %408 = vrot.lane.b32.xlu0 %v401, 64
  %v409 = vpop.permute.xlu0 %408
  %v411 = vmul.f32 %v400, %v409
  %413 = vrot.lane.b32.xlu0 %v411, 32
  %v414 = vpop.permute.xlu0 %413
  %v416 = vadd.f32 %v406, %v414
  %v417 = vtanh.pop %v416
  %419 = vrot.lane.b32.xlu0 %v417, 64
  %v420 = vpop.permute.xlu0 %419
  %v422 = vmul.f32 %v400, %v420
  %424 = vrot.lane.b32.xlu0 %v416, 96
  %v425 = vpop.permute.xlu0 %424
  %427 = vst.msk [vmem:[#allocation5] sm:$0xff] %vm111, %v425
  %429 = vrot.lane.b32.xlu0 %v422, 32
  %v430 = vpop.permute.xlu0 %429
  %432 = vst.msk [vmem:[#allocation4] sm:$0xff] %vm111, %v430
  %433 = vst.msk [vmem:[#allocation3 + $0x18] sm:$0xff] %vm111, %v430
  %v434 = vld [vmem:[#allocation4] sm:$0xff]
  %v435 = vld [vmem:[#allocation5] sm:$0xff]
  %v436 = vld [vmem:[#allocation2 + $0x20] sm:$0xff]
  %v438 = vsel %vm111, %v434, 0
  %440 = vmatpush.msra.mxu0 0.0
  %441 = vmatpush.msra.mxu0 0.0
  %442 = vmatpush.msra.mxu0 0.0
  %443 = vmatpush.msra.mxu0 0.0
  %444 = vmatpush.msra.mxu0 0.0
  %445 = vmatpush.msra.mxu0 0.0
  %446 = vmatpush.msra.mxu0 0.0
  %447 = vmatpush.msra.mxu0 0.0
  %448 = vmatpush.msra.mxu0 0.0
  %449 = vmatpush.msra.mxu0 0.0
  %450 = vmatpush.msra.mxu0 0.0
  %451 = vmatpush.msra.mxu0 0.0
  %452 = vmatpush.msra.mxu0 %v117
  %453 = vmatpush.msra.mxu0 %v116
  %454 = vmatpush.msra.mxu0 %v115
  %455 = vmatpush.msra.mxu0 %v114
  %456 = vmatmul.f32.gmra.mxu0 %v438
  %v457 = vpop.f32.mrf.mxu0
  %v458 = vadd.f32 0.0, %v457
  %459 = vdwg.mxu0
  %v460 = vadd.f32 %v436, %v458
  %v461 = vxor.u32 %v460, 2147483648
  %v462 = vmul.f32 %v461, 1.442695
  %v463 = vpow.pop %v462
  %v464 = vadd.f32 %v463, 1.0
  %v465 = vrcp.pop %v464
  %v466 = vmul.f32 %v464, %v465
  %v467 = vsub.f32 1.0, %v466
  %v468 = vmul.f32 %v465, %v467
  %v469 = vadd.f32 %v465, %v468
  %vm470 = vweird.f32 %v464
  %vm471 = vweird.f32 %v465
  %vm472 = vmor %vm470, %vm471
  %v473 = vsel %vm472, %v465, %v469
  %v474 = vand.u32 2147483647, %v464
  %vm475 = vcmp.eq.f32.partialorder %v474, 8.507059e+37
  %v476 = vand.u32 %v464, 2147483648
  %v477 = vor.u32 1.1754944e-38, %v476
  %v478 = vsel %vm475, %v477, %v473
  %v479 = vmul.f32 1.0, %v478
  %v480 = vtanh.pop %v460
  %482 = vrot.lane.b32.xlu0 %v435, 32
  %v483 = vpop.permute.xlu0 %482
  %v485 = vmul.f32 %v479, %v483
  %487 = vrot.lane.b32.xlu0 %v480, 64
  %v488 = vpop.permute.xlu0 %487
  %v490 = vmul.f32 %v479, %v488
  %492 = vrot.lane.b32.xlu0 %v490, 32
  %v493 = vpop.permute.xlu0 %492
  %v495 = vadd.f32 %v485, %v493
  %v496 = vtanh.pop %v495
  %498 = vrot.lane.b32.xlu0 %v496, 64
  %v499 = vpop.permute.xlu0 %498
  %v501 = vmul.f32 %v479, %v499
  %503 = vrot.lane.b32.xlu0 %v495, 96
  %v504 = vpop.permute.xlu0 %503
  %506 = vst.msk [vmem:[#allocation5] sm:$0xff] %vm111, %v504
  %508 = vrot.lane.b32.xlu0 %v501, 32
  %v509 = vpop.permute.xlu0 %508
  %511 = vst.msk [vmem:[#allocation4] sm:$0xff] %vm111, %v509
  %512 = vst.msk [vmem:[#allocation3 + $0x20] sm:$0xff] %vm111, %v509
  %v513 = vld [vmem:[#allocation4] sm:$0xff]
  %v514 = vld [vmem:[#allocation5] sm:$0xff]
  %v515 = vld [vmem:[#allocation2 + $0x28] sm:$0xff]
  %v517 = vsel %vm111, %v513, 0
  %519 = vmatpush.msra.mxu0 0.0
  %520 = vmatpush.msra.mxu0 0.0
  %521 = vmatpush.msra.mxu0 0.0
  %522 = vmatpush.msra.mxu0 0.0
  %523 = vmatpush.msra.mxu0 0.0
  %524 = vmatpush.msra.mxu0 0.0
  %525 = vmatpush.msra.mxu0 0.0
  %526 = vmatpush.msra.mxu0 0.0
  %527 = vmatpush.msra.mxu0 0.0
  %528 = vmatpush.msra.mxu0 0.0
  %529 = vmatpush.msra.mxu0 0.0
  %530 = vmatpush.msra.mxu0 0.0
  %531 = vmatpush.msra.mxu0 %v117
  %532 = vmatpush.msra.mxu0 %v116
  %533 = vmatpush.msra.mxu0 %v115
  %534 = vmatpush.msra.mxu0 %v114
  %535 = vmatmul.f32.gmra.mxu0 %v517
  %v536 = vpop.f32.mrf.mxu0
  %v537 = vadd.f32 0.0, %v536
  %538 = vdwg.mxu0
  %v539 = vadd.f32 %v515, %v537
  %v540 = vxor.u32 %v539, 2147483648
  %v541 = vmul.f32 %v540, 1.442695
  %v542 = vpow.pop %v541
  %v543 = vadd.f32 %v542, 1.0
  %v544 = vrcp.pop %v543
  %v545 = vmul.f32 %v543, %v544
  %v546 = vsub.f32 1.0, %v545
  %v547 = vmul.f32 %v544, %v546
  %v548 = vadd.f32 %v544, %v547
  %vm549 = vweird.f32 %v543
  %vm550 = vweird.f32 %v544
  %vm551 = vmor %vm549, %vm550
  %v552 = vsel %vm551, %v544, %v548
  %v553 = vand.u32 2147483647, %v543
  %vm554 = vcmp.eq.f32.partialorder %v553, 8.507059e+37
  %v555 = vand.u32 %v543, 2147483648
  %v556 = vor.u32 1.1754944e-38, %v555
  %v557 = vsel %vm554, %v556, %v552
  %v558 = vmul.f32 1.0, %v557
  %v559 = vtanh.pop %v539
  %561 = vrot.lane.b32.xlu0 %v514, 32
  %v562 = vpop.permute.xlu0 %561
  %v564 = vmul.f32 %v558, %v562
  %566 = vrot.lane.b32.xlu0 %v559, 64
  %v567 = vpop.permute.xlu0 %566
  %v569 = vmul.f32 %v558, %v567
  %571 = vrot.lane.b32.xlu0 %v569, 32
  %v572 = vpop.permute.xlu0 %571
  %v574 = vadd.f32 %v564, %v572
  %v575 = vtanh.pop %v574
  %577 = vrot.lane.b32.xlu0 %v575, 64
  %v578 = vpop.permute.xlu0 %577
  %v580 = vmul.f32 %v558, %v578
  %582 = vrot.lane.b32.xlu0 %v574, 96
  %v583 = vpop.permute.xlu0 %582
  %585 = vst.msk [vmem:[#allocation5] sm:$0xff] %vm111, %v583
  %587 = vrot.lane.b32.xlu0 %v580, 32
  %v588 = vpop.permute.xlu0 %587
  %590 = vst.msk [vmem:[#allocation4] sm:$0xff] %vm111, %v588
  %591 = vst.msk [vmem:[#allocation3 + $0x28] sm:$0xff] %vm111, %v588
  %v592 = vld [vmem:[#allocation4] sm:$0xff]
  %v593 = vld [vmem:[#allocation5] sm:$0xff]
  %v594 = vld [vmem:[#allocation2 + $0x30] sm:$0xff]
  %v596 = vsel %vm111, %v592, 0
  %598 = vmatpush.msra.mxu0 0.0
  %599 = vmatpush.msra.mxu0 0.0
  %600 = vmatpush.msra.mxu0 0.0
  %601 = vmatpush.msra.mxu0 0.0
  %602 = vmatpush.msra.mxu0 0.0
  %603 = vmatpush.msra.mxu0 0.0
  %604 = vmatpush.msra.mxu0 0.0
  %605 = vmatpush.msra.mxu0 0.0
  %606 = vmatpush.msra.mxu0 0.0
  %607 = vmatpush.msra.mxu0 0.0
  %608 = vmatpush.msra.mxu0 0.0
  %609 = vmatpush.msra.mxu0 0.0
  %610 = vmatpush.msra.mxu0 %v117
  %611 = vmatpush.msra.mxu0 %v116
  %612 = vmatpush.msra.mxu0 %v115
  %613 = vmatpush.msra.mxu0 %v114
  %614 = vmatmul.f32.gmra.mxu0 %v596
  %v615 = vpop.f32.mrf.mxu0
  %v616 = vadd.f32 0.0, %v615
  %617 = vdwg.mxu0
  %v618 = vadd.f32 %v594, %v616
  %v619 = vxor.u32 %v618, 2147483648
  %v620 = vmul.f32 %v619, 1.442695
  %v621 = vpow.pop %v620
  %v622 = vadd.f32 %v621, 1.0
  %v623 = vrcp.pop %v622
  %v624 = vmul.f32 %v622, %v623
  %v625 = vsub.f32 1.0, %v624
  %v626 = vmul.f32 %v623, %v625
  %v627 = vadd.f32 %v623, %v626
  %vm628 = vweird.f32 %v622
  %vm629 = vweird.f32 %v623
  %vm630 = vmor %vm628, %vm629
  %v631 = vsel %vm630, %v623, %v627
  %v632 = vand.u32 2147483647, %v622
  %vm633 = vcmp.eq.f32.partialorder %v632, 8.507059e+37
  %v634 = vand.u32 %v622, 2147483648
  %v635 = vor.u32 1.1754944e-38, %v634
  %v636 = vsel %vm633, %v635, %v631
  %v637 = vmul.f32 1.0, %v636
  %v638 = vtanh.pop %v618
  %640 = vrot.lane.b32.xlu0 %v593, 32
  %v641 = vpop.permute.xlu0 %640
  %v643 = vmul.f32 %v637, %v641
  %645 = vrot.lane.b32.xlu0 %v638, 64
  %v646 = vpop.permute.xlu0 %645
  %v648 = vmul.f32 %v637, %v646
  %650 = vrot.lane.b32.xlu0 %v648, 32
  %v651 = vpop.permute.xlu0 %650
  %v653 = vadd.f32 %v643, %v651
  %v654 = vtanh.pop %v653
  %656 = vrot.lane.b32.xlu0 %v654, 64
  %v657 = vpop.permute.xlu0 %656
  %v659 = vmul.f32 %v637, %v657
  %661 = vrot.lane.b32.xlu0 %v653, 96
  %v662 = vpop.permute.xlu0 %661
  %664 = vst.msk [vmem:[#allocation5] sm:$0xff] %vm111, %v662
  %666 = vrot.lane.b32.xlu0 %v659, 32
  %v667 = vpop.permute.xlu0 %666
  %669 = vst.msk [vmem:[#allocation4] sm:$0xff] %vm111, %v667
  %670 = vst.msk [vmem:[#allocation3 + $0x30] sm:$0xff] %vm111, %v667
  %v671 = vld [vmem:[#allocation4] sm:$0xff]
  %v672 = vld [vmem:[#allocation5] sm:$0xff]
  %v673 = vld [vmem:[#allocation2 + $0x38] sm:$0xff]
  %v675 = vsel %vm111, %v671, 0
  %677 = vmatpush.msra.mxu0 0.0
  %678 = vmatpush.msra.mxu0 0.0
  %679 = vmatpush.msra.mxu0 0.0
  %680 = vmatpush.msra.mxu0 0.0
  %681 = vmatpush.msra.mxu0 0.0
  %682 = vmatpush.msra.mxu0 0.0
  %683 = vmatpush.msra.mxu0 0.0
  %684 = vmatpush.msra.mxu0 0.0
  %685 = vmatpush.msra.mxu0 0.0
  %686 = vmatpush.msra.mxu0 0.0
  %687 = vmatpush.msra.mxu0 0.0
  %688 = vmatpush.msra.mxu0 0.0
  %689 = vmatpush.msra.mxu0 %v117
  %690 = vmatpush.msra.mxu0 %v116
  %691 = vmatpush.msra.mxu0 %v115
  %692 = vmatpush.msra.mxu0 %v114
  %693 = vmatmul.f32.gmra.mxu0 %v675
  %v694 = vpop.f32.mrf.mxu0
  %v695 = vadd.f32 0.0, %v694
  %696 = vdwg.mxu0
  %v697 = vadd.f32 %v673, %v695
  %v698 = vxor.u32 %v697, 2147483648
  %v699 = vmul.f32 %v698, 1.442695
  %v700 = vpow.pop %v699
  %v701 = vadd.f32 %v700, 1.0
  %v702 = vrcp.pop %v701
  %v703 = vmul.f32 %v701, %v702
  %v704 = vsub.f32 1.0, %v703
  %v705 = vmul.f32 %v702, %v704
  %v706 = vadd.f32 %v702, %v705
  %vm707 = vweird.f32 %v701
  %vm708 = vweird.f32 %v702
  %vm709 = vmor %vm707, %vm708
  %v710 = vsel %vm709, %v702, %v706
  %v711 = vand.u32 2147483647, %v701
  %vm712 = vcmp.eq.f32.partialorder %v711, 8.507059e+37
  %v713 = vand.u32 %v701, 2147483648
  %v714 = vor.u32 1.1754944e-38, %v713
  %v715 = vsel %vm712, %v714, %v710
  %v716 = vmul.f32 1.0, %v715
  %v717 = vtanh.pop %v697
  %719 = vrot.lane.b32.xlu0 %v672, 32
  %v720 = vpop.permute.xlu0 %719
  %v722 = vmul.f32 %v716, %v720
  %724 = vrot.lane.b32.xlu0 %v717, 64
  %v725 = vpop.permute.xlu0 %724
  %v727 = vmul.f32 %v716, %v725
  %729 = vrot.lane.b32.xlu0 %v727, 32
  %v730 = vpop.permute.xlu0 %729
  %v732 = vadd.f32 %v722, %v730
  %v733 = vtanh.pop %v732
  %735 = vrot.lane.b32.xlu0 %v733, 64
  %v736 = vpop.permute.xlu0 %735
  %v738 = vmul.f32 %v716, %v736
  %740 = vrot.lane.b32.xlu0 %v732, 96
  %v741 = vpop.permute.xlu0 %740
  %743 = vst.msk [vmem:[#allocation5] sm:$0xff] %vm111, %v741
  %745 = vrot.lane.b32.xlu0 %v738, 32
  %v746 = vpop.permute.xlu0 %745
  %748 = vst.msk [vmem:[#allocation4] sm:$0xff] %vm111, %v746
  %749 = vst.msk [vmem:[#allocation3 + $0x38] sm:$0xff] %vm111, %v746
  %v750 = vld [vmem:[#allocation3] sm:$0xff]
  %v751 = vld [vmem:[#allocation3 + $0x8] sm:$0xff]
  %v752 = vld [vmem:[#allocation3 + $0x10] sm:$0xff]
  %v753 = vld [vmem:[#allocation3 + $0x18] sm:$0xff]
  %v754 = vld [vmem:[#allocation3 + $0x20] sm:$0xff]
  %v755 = vld [vmem:[#allocation3 + $0x28] sm:$0xff]
  %v756 = vld [vmem:[#allocation3 + $0x30] sm:$0xff]
  %v757 = vld [vmem:[#allocation3 + $0x38] sm:$0xff]
  %v758 = vld [vmem:[%s3] sm:$0xff]
  %v759 = vld [vmem:[%s3 + $0x8] sm:$0xff]
  %v760 = vld [vmem:[%s3 + $0x10] sm:$0xff]
  %v761 = vld [vmem:[%s3 + $0x18] sm:$0xff]
  %v762 = vld [vmem:[%s5] sm:$0x1]
  %v764 = vperm.slane %v762, 0
  %v767 = vsel %vm111, %v750, 0
  %v770 = vsel %vm111, %v751, 0
  %v773 = vsel %vm111, %v752, 0
  %v776 = vsel %vm111, %v753, 0
  %v779 = vsel %vm111, %v754, 0
  %v782 = vsel %vm111, %v755, 0
  %v785 = vsel %vm111, %v756, 0
  %v788 = vsel %vm111, %v757, 0
  %790 = vmatpush.msra.mxu0 0.0
  %791 = vmatpush.msra.mxu0 0.0
  %792 = vmatpush.msra.mxu0 0.0
  %793 = vmatpush.msra.mxu0 0.0
  %794 = vmatpush.msra.mxu0 0.0
  %795 = vmatpush.msra.mxu0 0.0
  %796 = vmatpush.msra.mxu0 0.0
  %797 = vmatpush.msra.mxu0 0.0
  %798 = vmatpush.msra.mxu0 0.0
  %799 = vmatpush.msra.mxu0 0.0
  %800 = vmatpush.msra.mxu0 0.0
  %801 = vmatpush.msra.mxu0 0.0
  %802 = vmatpush.msra.mxu0 %v761
  %803 = vmatpush.msra.mxu0 %v760
  %804 = vmatpush.msra.mxu0 %v759
  %805 = vmatpush.msra.mxu0 %v758
  %806 = vmatmul.f32.gmra.mxu0 %v767
  %v807 = vpop.f32.mrf.mxu0
  %v808 = vadd.f32 %v764, %v807
  %809 = vmatmul.f32.gmra.mxu0 %v770
  %v810 = vpop.f32.mrf.mxu0
  %v811 = vadd.f32 %v764, %v810
  %812 = vmatmul.f32.gmra.mxu0 %v773
  %v813 = vpop.f32.mrf.mxu0
  %v814 = vadd.f32 %v764, %v813
  %815 = vmatmul.f32.gmra.mxu0 %v776
  %v816 = vpop.f32.mrf.mxu0
  %v817 = vadd.f32 %v764, %v816
  %818 = vmatmul.f32.gmra.mxu0 %v779
  %v819 = vpop.f32.mrf.mxu0
  %v820 = vadd.f32 %v764, %v819
  %821 = vmatmul.f32.gmra.mxu0 %v782
  %v822 = vpop.f32.mrf.mxu0
  %v823 = vadd.f32 %v764, %v822
  %824 = vmatmul.f32.gmra.mxu0 %v785
  %v825 = vpop.f32.mrf.mxu0
  %v826 = vadd.f32 %v764, %v825
  %827 = vmatmul.f32.gmra.mxu0 %v788
  %v828 = vpop.f32.mrf.mxu0
  %v829 = vadd.f32 %v764, %v828
  %830 = vdwg.mxu0
  %831 = vst [vmem:[#allocation2] sm:$0xff] %v808
  %832 = vst [vmem:[#allocation2 + $0x8] sm:$0xff] %v811
  %833 = vst [vmem:[#allocation2 + $0x10] sm:$0xff] %v814
  %834 = vst [vmem:[#allocation2 + $0x18] sm:$0xff] %v817
  %835 = vst [vmem:[#allocation2 + $0x20] sm:$0xff] %v820
  %836 = vst [vmem:[#allocation2 + $0x28] sm:$0xff] %v823
  %837 = vst [vmem:[#allocation2 + $0x30] sm:$0xff] %v826
  %838 = vst [vmem:[#allocation2 + $0x38] sm:$0xff] %v829
  %839 = vst.msk [vmem:[#allocation4] sm:$0xff] %vm111, 0.0
  %840 = vst.msk [vmem:[#allocation5] sm:$0xff] %vm111, 0.0
  %s841 = scalar_lea.vmem %s4, 32
  %v842 = vld [vmem:[%s841] sm:$0xff]
  %v843 = vld [vmem:[%s841 + $0x8] sm:$0xff]
  %v844 = vld [vmem:[%s841 + $0x10] sm:$0xff]
  %v845 = vld [vmem:[%s841 + $0x18] sm:$0xff]
  %v846 = vld [vmem:[#allocation4] sm:$0xff]
  %v847 = vld [vmem:[#allocation5] sm:$0xff]
  %v848 = vld [vmem:[#allocation2] sm:$0xff]
  %v850 = vsel %vm111, %v846, 0
  %852 = vmatpush.msra.mxu0 0.0
  %853 = vmatpush.msra.mxu0 0.0
  %854 = vmatpush.msra.mxu0 0.0
  %855 = vmatpush.msra.mxu0 0.0
  %856 = vmatpush.msra.mxu0 0.0
  %857 = vmatpush.msra.mxu0 0.0
  %858 = vmatpush.msra.mxu0 0.0
  %859 = vmatpush.msra.mxu0 0.0
  %860 = vmatpush.msra.mxu0 0.0
  %861 = vmatpush.msra.mxu0 0.0
  %862 = vmatpush.msra.mxu0 0.0
  %863 = vmatpush.msra.mxu0 0.0
  %864 = vmatpush.msra.mxu0 %v845
  %865 = vmatpush.msra.mxu0 %v844
  %866 = vmatpush.msra.mxu0 %v843
  %867 = vmatpush.msra.mxu0 %v842
  %868 = vmatmul.f32.gmra.mxu0 %v850
  %v869 = vpop.f32.mrf.mxu0
  %v870 = vadd.f32 0.0, %v869
  %871 = vdwg.mxu0
  %v872 = vadd.f32 %v848, %v870
  %v873 = vxor.u32 %v872, 2147483648
  %v874 = vmul.f32 %v873, 1.442695
  %v875 = vpow.pop %v874
  %v876 = vadd.f32 %v875, 1.0
  %v877 = vrcp.pop %v876
  %v878 = vmul.f32 %v876, %v877
  %v879 = vsub.f32 1.0, %v878
  %v880 = vmul.f32 %v877, %v879
  %v881 = vadd.f32 %v877, %v880
  %vm882 = vweird.f32 %v876
  %vm883 = vweird.f32 %v877
  %vm884 = vmor %vm882, %vm883
  %v885 = vsel %vm884, %v877, %v881
  %v886 = vand.u32 2147483647, %v876
  %vm887 = vcmp.eq.f32.partialorder %v886, 8.507059e+37
  %v888 = vand.u32 %v876, 2147483648
  %v889 = vor.u32 1.1754944e-38, %v888
  %v890 = vsel %vm887, %v889, %v885
  %v891 = vmul.f32 1.0, %v890
  %v892 = vtanh.pop %v872
  %894 = vrot.lane.b32.xlu0 %v847, 32
  %v895 = vpop.permute.xlu0 %894
  %v897 = vmul.f32 %v891, %v895
  %899 = vrot.lane.b32.xlu0 %v892, 64
  %v900 = vpop.permute.xlu0 %899
  %v902 = vmul.f32 %v891, %v900
  %904 = vrot.lane.b32.xlu0 %v902, 32
  %v905 = vpop.permute.xlu0 %904
  %v907 = vadd.f32 %v897, %v905
  %v908 = vtanh.pop %v907
  %910 = vrot.lane.b32.xlu0 %v908, 64
  %v911 = vpop.permute.xlu0 %910
  %v913 = vmul.f32 %v891, %v911
  %915 = vrot.lane.b32.xlu0 %v907, 96
  %v916 = vpop.permute.xlu0 %915
  %918 = vst.msk [vmem:[#allocation5] sm:$0xff] %vm111, %v916
  %920 = vrot.lane.b32.xlu0 %v913, 32
  %v921 = vpop.permute.xlu0 %920
  %923 = vst.msk [vmem:[#allocation4] sm:$0xff] %vm111, %v921
  %924 = vst.msk [vmem:[#allocation3] sm:$0xff] %vm111, %v921
  %v925 = vld [vmem:[#allocation4] sm:$0xff]
  %v926 = vld [vmem:[#allocation5] sm:$0xff]
  %v927 = vld [vmem:[#allocation2 + $0x8] sm:$0xff]
  %v929 = vsel %vm111, %v925, 0
  %931 = vmatpush.msra.mxu0 0.0
  %932 = vmatpush.msra.mxu0 0.0
  %933 = vmatpush.msra.mxu0 0.0
  %934 = vmatpush.msra.mxu0 0.0
  %935 = vmatpush.msra.mxu0 0.0
  %936 = vmatpush.msra.mxu0 0.0
  %937 = vmatpush.msra.mxu0 0.0
  %938 = vmatpush.msra.mxu0 0.0
  %939 = vmatpush.msra.mxu0 0.0
  %940 = vmatpush.msra.mxu0 0.0
  %941 = vmatpush.msra.mxu0 0.0
  %942 = vmatpush.msra.mxu0 0.0
  %943 = vmatpush.msra.mxu0 %v845
  %944 = vmatpush.msra.mxu0 %v844
  %945 = vmatpush.msra.mxu0 %v843
  %946 = vmatpush.msra.mxu0 %v842
  %947 = vmatmul.f32.gmra.mxu0 %v929
  %v948 = vpop.f32.mrf.mxu0
  %v949 = vadd.f32 0.0, %v948
  %950 = vdwg.mxu0
  %v951 = vadd.f32 %v927, %v949
  %v952 = vxor.u32 %v951, 2147483648
  %v953 = vmul.f32 %v952, 1.442695
  %v954 = vpow.pop %v953
  %v955 = vadd.f32 %v954, 1.0
  %v956 = vrcp.pop %v955
  %v957 = vmul.f32 %v955, %v956
  %v958 = vsub.f32 1.0, %v957
  %v959 = vmul.f32 %v956, %v958
  %v960 = vadd.f32 %v956, %v959
  %vm961 = vweird.f32 %v955
  %vm962 = vweird.f32 %v956
  %vm963 = vmor %vm961, %vm962
  %v964 = vsel %vm963, %v956, %v960
  %v965 = vand.u32 2147483647, %v955
  %vm966 = vcmp.eq.f32.partialorder %v965, 8.507059e+37
  %v967 = vand.u32 %v955, 2147483648
  %v968 = vor.u32 1.1754944e-38, %v967
  %v969 = vsel %vm966, %v968, %v964
  %v970 = vmul.f32 1.0, %v969
  %v971 = vtanh.pop %v951
  %973 = vrot.lane.b32.xlu0 %v926, 32
  %v974 = vpop.permute.xlu0 %973
  %v976 = vmul.f32 %v970, %v974
  %978 = vrot.lane.b32.xlu0 %v971, 64
  %v979 = vpop.permute.xlu0 %978
  %v981 = vmul.f32 %v970, %v979
  %983 = vrot.lane.b32.xlu0 %v981, 32
  %v984 = vpop.permute.xlu0 %983
  %v986 = vadd.f32 %v976, %v984
  %v987 = vtanh.pop %v986
  %989 = vrot.lane.b32.xlu0 %v987, 64
  %v990 = vpop.permute.xlu0 %989
  %v992 = vmul.f32 %v970, %v990
  %994 = vrot.lane.b32.xlu0 %v986, 96
  %v995 = vpop.permute.xlu0 %994
  %997 = vst.msk [vmem:[#allocation5] sm:$0xff] %vm111, %v995
  %999 = vrot.lane.b32.xlu0 %v992, 32
  %v1000 = vpop.permute.xlu0 %999
  %1002 = vst.msk [vmem:[#allocation4] sm:$0xff] %vm111, %v1000
  %1003 = vst.msk [vmem:[#allocation3 + $0x8] sm:$0xff] %vm111, %v1000
  %v1004 = vld [vmem:[#allocation4] sm:$0xff]
  %v1005 = vld [vmem:[#allocation5] sm:$0xff]
  %v1006 = vld [vmem:[#allocation2 + $0x10] sm:$0xff]
  %v1008 = vsel %vm111, %v1004, 0
  %1010 = vmatpush.msra.mxu0 0.0
  %1011 = vmatpush.msra.mxu0 0.0
  %1012 = vmatpush.msra.mxu0 0.0
  %1013 = vmatpush.msra.mxu0 0.0
  %1014 = vmatpush.msra.mxu0 0.0
  %1015 = vmatpush.msra.mxu0 0.0
  %1016 = vmatpush.msra.mxu0 0.0
  %1017 = vmatpush.msra.mxu0 0.0
  %1018 = vmatpush.msra.mxu0 0.0
  %1019 = vmatpush.msra.mxu0 0.0
  %1020 = vmatpush.msra.mxu0 0.0
  %1021 = vmatpush.msra.mxu0 0.0
  %1022 = vmatpush.msra.mxu0 %v845
  %1023 = vmatpush.msra.mxu0 %v844
  %1024 = vmatpush.msra.mxu0 %v843
  %1025 = vmatpush.msra.mxu0 %v842
  %1026 = vmatmul.f32.gmra.mxu0 %v1008
  %v1027 = vpop.f32.mrf.mxu0
  %v1028 = vadd.f32 0.0, %v1027
  %1029 = vdwg.mxu0
  %v1030 = vadd.f32 %v1006, %v1028
  %v1031 = vxor.u32 %v1030, 2147483648
  %v1032 = vmul.f32 %v1031, 1.442695
  %v1033 = vpow.pop %v1032
  %v1034 = vadd.f32 %v1033, 1.0
  %v1035 = vrcp.pop %v1034
  %v1036 = vmul.f32 %v1034, %v1035
  %v1037 = vsub.f32 1.0, %v1036
  %v1038 = vmul.f32 %v1035, %v1037
  %v1039 = vadd.f32 %v1035, %v1038
  %vm1040 = vweird.f32 %v1034
  %vm1041 = vweird.f32 %v1035
  %vm1042 = vmor %vm1040, %vm1041
  %v1043 = vsel %vm1042, %v1035, %v1039
  %v1044 = vand.u32 2147483647, %v1034
  %vm1045 = vcmp.eq.f32.partialorder %v1044, 8.507059e+37
  %v1046 = vand.u32 %v1034, 2147483648
  %v1047 = vor.u32 1.1754944e-38, %v1046
  %v1048 = vsel %vm1045, %v1047, %v1043
  %v1049 = vmul.f32 1.0, %v1048
  %v1050 = vtanh.pop %v1030
  %1052 = vrot.lane.b32.xlu0 %v1005, 32
  %v1053 = vpop.permute.xlu0 %1052
  %v1055 = vmul.f32 %v1049, %v1053
  %1057 = vrot.lane.b32.xlu0 %v1050, 64
  %v1058 = vpop.permute.xlu0 %1057
  %v1060 = vmul.f32 %v1049, %v1058
  %1062 = vrot.lane.b32.xlu0 %v1060, 32
  %v1063 = vpop.permute.xlu0 %1062
  %v1065 = vadd.f32 %v1055, %v1063
  %v1066 = vtanh.pop %v1065
  %1068 = vrot.lane.b32.xlu0 %v1066, 64
  %v1069 = vpop.permute.xlu0 %1068
  %v1071 = vmul.f32 %v1049, %v1069
  %1073 = vrot.lane.b32.xlu0 %v1065, 96
  %v1074 = vpop.permute.xlu0 %1073
  %1076 = vst.msk [vmem:[#allocation5] sm:$0xff] %vm111, %v1074
  %1078 = vrot.lane.b32.xlu0 %v1071, 32
  %v1079 = vpop.permute.xlu0 %1078
  %1081 = vst.msk [vmem:[#allocation4] sm:$0xff] %vm111, %v1079
  %1082 = vst.msk [vmem:[#allocation3 + $0x10] sm:$0xff] %vm111, %v1079
  %v1083 = vld [vmem:[#allocation4] sm:$0xff]
  %v1084 = vld [vmem:[#allocation5] sm:$0xff]
  %v1085 = vld [vmem:[#allocation2 + $0x18] sm:$0xff]
  %v1087 = vsel %vm111, %v1083, 0
  %1089 = vmatpush.msra.mxu0 0.0
  %1090 = vmatpush.msra.mxu0 0.0
  %1091 = vmatpush.msra.mxu0 0.0
  %1092 = vmatpush.msra.mxu0 0.0
  %1093 = vmatpush.msra.mxu0 0.0
  %1094 = vmatpush.msra.mxu0 0.0
  %1095 = vmatpush.msra.mxu0 0.0
  %1096 = vmatpush.msra.mxu0 0.0
  %1097 = vmatpush.msra.mxu0 0.0
  %1098 = vmatpush.msra.mxu0 0.0
  %1099 = vmatpush.msra.mxu0 0.0
  %1100 = vmatpush.msra.mxu0 0.0
  %1101 = vmatpush.msra.mxu0 %v845
  %1102 = vmatpush.msra.mxu0 %v844
  %1103 = vmatpush.msra.mxu0 %v843
  %1104 = vmatpush.msra.mxu0 %v842
  %1105 = vmatmul.f32.gmra.mxu0 %v1087
  %v1106 = vpop.f32.mrf.mxu0
  %v1107 = vadd.f32 0.0, %v1106
  %1108 = vdwg.mxu0
  %v1109 = vadd.f32 %v1085, %v1107
  %v1110 = vxor.u32 %v1109, 2147483648
  %v1111 = vmul.f32 %v1110, 1.442695
  %v1112 = vpow.pop %v1111
  %v1113 = vadd.f32 %v1112, 1.0
  %v1114 = vrcp.pop %v1113
  %v1115 = vmul.f32 %v1113, %v1114
  %v1116 = vsub.f32 1.0, %v1115
  %v1117 = vmul.f32 %v1114, %v1116
  %v1118 = vadd.f32 %v1114, %v1117
  %vm1119 = vweird.f32 %v1113
  %vm1120 = vweird.f32 %v1114
  %vm1121 = vmor %vm1119, %vm1120
  %v1122 = vsel %vm1121, %v1114, %v1118
  %v1123 = vand.u32 2147483647, %v1113
  %vm1124 = vcmp.eq.f32.partialorder %v1123, 8.507059e+37
  %v1125 = vand.u32 %v1113, 2147483648
  %v1126 = vor.u32 1.1754944e-38, %v1125
  %v1127 = vsel %vm1124, %v1126, %v1122
  %v1128 = vmul.f32 1.0, %v1127
  %v1129 = vtanh.pop %v1109
  %1131 = vrot.lane.b32.xlu0 %v1084, 32
  %v1132 = vpop.permute.xlu0 %1131
  %v1134 = vmul.f32 %v1128, %v1132
  %1136 = vrot.lane.b32.xlu0 %v1129, 64
  %v1137 = vpop.permute.xlu0 %1136
  %v1139 = vmul.f32 %v1128, %v1137
  %1141 = vrot.lane.b32.xlu0 %v1139, 32
  %v1142 = vpop.permute.xlu0 %1141
  %v1144 = vadd.f32 %v1134, %v1142
  %v1145 = vtanh.pop %v1144
  %1147 = vrot.lane.b32.xlu0 %v1145, 64
  %v1148 = vpop.permute.xlu0 %1147
  %v1150 = vmul.f32 %v1128, %v1148
  %1152 = vrot.lane.b32.xlu0 %v1144, 96
  %v1153 = vpop.permute.xlu0 %1152
  %1155 = vst.msk [vmem:[#allocation5] sm:$0xff] %vm111, %v1153
  %1157 = vrot.lane.b32.xlu0 %v1150, 32
  %v1158 = vpop.permute.xlu0 %1157
  %1160 = vst.msk [vmem:[#allocation4] sm:$0xff] %vm111, %v1158
  %1161 = vst.msk [vmem:[#allocation3 + $0x18] sm:$0xff] %vm111, %v1158
  %v1162 = vld [vmem:[#allocation4] sm:$0xff]
  %v1163 = vld [vmem:[#allocation5] sm:$0xff]
  %v1164 = vld [vmem:[#allocation2 + $0x20] sm:$0xff]
  %v1166 = vsel %vm111, %v1162, 0
  %1168 = vmatpush.msra.mxu0 0.0
  %1169 = vmatpush.msra.mxu0 0.0
  %1170 = vmatpush.msra.mxu0 0.0
  %1171 = vmatpush.msra.mxu0 0.0
  %1172 = vmatpush.msra.mxu0 0.0
  %1173 = vmatpush.msra.mxu0 0.0
  %1174 = vmatpush.msra.mxu0 0.0
  %1175 = vmatpush.msra.mxu0 0.0
  %1176 = vmatpush.msra.mxu0 0.0
  %1177 = vmatpush.msra.mxu0 0.0
  %1178 = vmatpush.msra.mxu0 0.0
  %1179 = vmatpush.msra.mxu0 0.0
  %1180 = vmatpush.msra.mxu0 %v845
  %1181 = vmatpush.msra.mxu0 %v844
  %1182 = vmatpush.msra.mxu0 %v843
  %1183 = vmatpush.msra.mxu0 %v842
  %1184 = vmatmul.f32.gmra.mxu0 %v1166
  %v1185 = vpop.f32.mrf.mxu0
  %v1186 = vadd.f32 0.0, %v1185
  %1187 = vdwg.mxu0
  %v1188 = vadd.f32 %v1164, %v1186
  %v1189 = vxor.u32 %v1188, 2147483648
  %v1190 = vmul.f32 %v1189, 1.442695
  %v1191 = vpow.pop %v1190
  %v1192 = vadd.f32 %v1191, 1.0
  %v1193 = vrcp.pop %v1192
  %v1194 = vmul.f32 %v1192, %v1193
  %v1195 = vsub.f32 1.0, %v1194
  %v1196 = vmul.f32 %v1193, %v1195
  %v1197 = vadd.f32 %v1193, %v1196
  %vm1198 = vweird.f32 %v1192
  %vm1199 = vweird.f32 %v1193
  %vm1200 = vmor %vm1198, %vm1199
  %v1201 = vsel %vm1200, %v1193, %v1197
  %v1202 = vand.u32 2147483647, %v1192
  %vm1203 = vcmp.eq.f32.partialorder %v1202, 8.507059e+37
  %v1204 = vand.u32 %v1192, 2147483648
  %v1205 = vor.u32 1.1754944e-38, %v1204
  %v1206 = vsel %vm1203, %v1205, %v1201
  %v1207 = vmul.f32 1.0, %v1206
  %v1208 = vtanh.pop %v1188
  %1210 = vrot.lane.b32.xlu0 %v1163, 32
  %v1211 = vpop.permute.xlu0 %1210
  %v1213 = vmul.f32 %v1207, %v1211
  %1215 = vrot.lane.b32.xlu0 %v1208, 64
  %v1216 = vpop.permute.xlu0 %1215
  %v1218 = vmul.f32 %v1207, %v1216
  %1220 = vrot.lane.b32.xlu0 %v1218, 32
  %v1221 = vpop.permute.xlu0 %1220
  %v1223 = vadd.f32 %v1213, %v1221
  %v1224 = vtanh.pop %v1223
  %1226 = vrot.lane.b32.xlu0 %v1224, 64
  %v1227 = vpop.permute.xlu0 %1226
  %v1229 = vmul.f32 %v1207, %v1227
  %1231 = vrot.lane.b32.xlu0 %v1223, 96
  %v1232 = vpop.permute.xlu0 %1231
  %1234 = vst.msk [vmem:[#allocation5] sm:$0xff] %vm111, %v1232
  %1236 = vrot.lane.b32.xlu0 %v1229, 32
  %v1237 = vpop.permute.xlu0 %1236
  %1239 = vst.msk [vmem:[#allocation4] sm:$0xff] %vm111, %v1237
  %1240 = vst.msk [vmem:[#allocation3 + $0x20] sm:$0xff] %vm111, %v1237
  %v1241 = vld [vmem:[#allocation4] sm:$0xff]
  %v1242 = vld [vmem:[#allocation5] sm:$0xff]
  %v1243 = vld [vmem:[#allocation2 + $0x28] sm:$0xff]
  %v1245 = vsel %vm111, %v1241, 0
  %1247 = vmatpush.msra.mxu0 0.0
  %1248 = vmatpush.msra.mxu0 0.0
  %1249 = vmatpush.msra.mxu0 0.0
  %1250 = vmatpush.msra.mxu0 0.0
  %1251 = vmatpush.msra.mxu0 0.0
  %1252 = vmatpush.msra.mxu0 0.0
  %1253 = vmatpush.msra.mxu0 0.0
  %1254 = vmatpush.msra.mxu0 0.0
  %1255 = vmatpush.msra.mxu0 0.0
  %1256 = vmatpush.msra.mxu0 0.0
  %1257 = vmatpush.msra.mxu0 0.0
  %1258 = vmatpush.msra.mxu0 0.0
  %1259 = vmatpush.msra.mxu0 %v845
  %1260 = vmatpush.msra.mxu0 %v844
  %1261 = vmatpush.msra.mxu0 %v843
  %1262 = vmatpush.msra.mxu0 %v842
  %1263 = vmatmul.f32.gmra.mxu0 %v1245
  %v1264 = vpop.f32.mrf.mxu0
  %v1265 = vadd.f32 0.0, %v1264
  %1266 = vdwg.mxu0
  %v1267 = vadd.f32 %v1243, %v1265
  %v1268 = vxor.u32 %v1267, 2147483648
  %v1269 = vmul.f32 %v1268, 1.442695
  %v1270 = vpow.pop %v1269
  %v1271 = vadd.f32 %v1270, 1.0
  %v1272 = vrcp.pop %v1271
  %v1273 = vmul.f32 %v1271, %v1272
  %v1274 = vsub.f32 1.0, %v1273
  %v1275 = vmul.f32 %v1272, %v1274
  %v1276 = vadd.f32 %v1272, %v1275
  %vm1277 = vweird.f32 %v1271
  %vm1278 = vweird.f32 %v1272
  %vm1279 = vmor %vm1277, %vm1278
  %v1280 = vsel %vm1279, %v1272, %v1276
  %v1281 = vand.u32 2147483647, %v1271
  %vm1282 = vcmp.eq.f32.partialorder %v1281, 8.507059e+37
  %v1283 = vand.u32 %v1271, 2147483648
  %v1284 = vor.u32 1.1754944e-38, %v1283
  %v1285 = vsel %vm1282, %v1284, %v1280
  %v1286 = vmul.f32 1.0, %v1285
  %v1287 = vtanh.pop %v1267
  %1289 = vrot.lane.b32.xlu0 %v1242, 32
  %v1290 = vpop.permute.xlu0 %1289
  %v1292 = vmul.f32 %v1286, %v1290
  %1294 = vrot.lane.b32.xlu0 %v1287, 64
  %v1295 = vpop.permute.xlu0 %1294
  %v1297 = vmul.f32 %v1286, %v1295
  %1299 = vrot.lane.b32.xlu0 %v1297, 32
  %v1300 = vpop.permute.xlu0 %1299
  %v1302 = vadd.f32 %v1292, %v1300
  %v1303 = vtanh.pop %v1302
  %1305 = vrot.lane.b32.xlu0 %v1303, 64
  %v1306 = vpop.permute.xlu0 %1305
  %v1308 = vmul.f32 %v1286, %v1306
  %1310 = vrot.lane.b32.xlu0 %v1302, 96
  %v1311 = vpop.permute.xlu0 %1310
  %1313 = vst.msk [vmem:[#allocation5] sm:$0xff] %vm111, %v1311
  %1315 = vrot.lane.b32.xlu0 %v1308, 32
  %v1316 = vpop.permute.xlu0 %1315
  %1318 = vst.msk [vmem:[#allocation4] sm:$0xff] %vm111, %v1316
  %1319 = vst.msk [vmem:[#allocation3 + $0x28] sm:$0xff] %vm111, %v1316
  %v1320 = vld [vmem:[#allocation4] sm:$0xff]
  %v1321 = vld [vmem:[#allocation5] sm:$0xff]
  %v1322 = vld [vmem:[#allocation2 + $0x30] sm:$0xff]
  %v1324 = vsel %vm111, %v1320, 0
  %1326 = vmatpush.msra.mxu0 0.0
  %1327 = vmatpush.msra.mxu0 0.0
  %1328 = vmatpush.msra.mxu0 0.0
  %1329 = vmatpush.msra.mxu0 0.0
  %1330 = vmatpush.msra.mxu0 0.0
  %1331 = vmatpush.msra.mxu0 0.0
  %1332 = vmatpush.msra.mxu0 0.0
  %1333 = vmatpush.msra.mxu0 0.0
  %1334 = vmatpush.msra.mxu0 0.0
  %1335 = vmatpush.msra.mxu0 0.0
  %1336 = vmatpush.msra.mxu0 0.0
  %1337 = vmatpush.msra.mxu0 0.0
  %1338 = vmatpush.msra.mxu0 %v845
  %1339 = vmatpush.msra.mxu0 %v844
  %1340 = vmatpush.msra.mxu0 %v843
  %1341 = vmatpush.msra.mxu0 %v842
  %1342 = vmatmul.f32.gmra.mxu0 %v1324
  %v1343 = vpop.f32.mrf.mxu0
  %v1344 = vadd.f32 0.0, %v1343
  %1345 = vdwg.mxu0
  %v1346 = vadd.f32 %v1322, %v1344
  %v1347 = vxor.u32 %v1346, 2147483648
  %v1348 = vmul.f32 %v1347, 1.442695
  %v1349 = vpow.pop %v1348
  %v1350 = vadd.f32 %v1349, 1.0
  %v1351 = vrcp.pop %v1350
  %v1352 = vmul.f32 %v1350, %v1351
  %v1353 = vsub.f32 1.0, %v1352
  %v1354 = vmul.f32 %v1351, %v1353
  %v1355 = vadd.f32 %v1351, %v1354
  %vm1356 = vweird.f32 %v1350
  %vm1357 = vweird.f32 %v1351
  %vm1358 = vmor %vm1356, %vm1357
  %v1359 = vsel %vm1358, %v1351, %v1355
  %v1360 = vand.u32 2147483647, %v1350
  %vm1361 = vcmp.eq.f32.partialorder %v1360, 8.507059e+37
  %v1362 = vand.u32 %v1350, 2147483648
  %v1363 = vor.u32 1.1754944e-38, %v1362
  %v1364 = vsel %vm1361, %v1363, %v1359
  %v1365 = vmul.f32 1.0, %v1364
  %v1366 = vtanh.pop %v1346
  %1368 = vrot.lane.b32.xlu0 %v1321, 32
  %v1369 = vpop.permute.xlu0 %1368
  %v1371 = vmul.f32 %v1365, %v1369
  %1373 = vrot.lane.b32.xlu0 %v1366, 64
  %v1374 = vpop.permute.xlu0 %1373
  %v1376 = vmul.f32 %v1365, %v1374
  %1378 = vrot.lane.b32.xlu0 %v1376, 32
  %v1379 = vpop.permute.xlu0 %1378
  %v1381 = vadd.f32 %v1371, %v1379
  %v1382 = vtanh.pop %v1381
  %1384 = vrot.lane.b32.xlu0 %v1382, 64
  %v1385 = vpop.permute.xlu0 %1384
  %v1387 = vmul.f32 %v1365, %v1385
  %1389 = vrot.lane.b32.xlu0 %v1381, 96
  %v1390 = vpop.permute.xlu0 %1389
  %1392 = vst.msk [vmem:[#allocation5] sm:$0xff] %vm111, %v1390
  %1394 = vrot.lane.b32.xlu0 %v1387, 32
  %v1395 = vpop.permute.xlu0 %1394
  %1397 = vst.msk [vmem:[#allocation4] sm:$0xff] %vm111, %v1395
  %1398 = vst.msk [vmem:[#allocation3 + $0x30] sm:$0xff] %vm111, %v1395
  %v1399 = vld [vmem:[#allocation4] sm:$0xff]
  %v1400 = vld [vmem:[#allocation5] sm:$0xff]
  %v1401 = vld [vmem:[#allocation2 + $0x38] sm:$0xff]
  %v1403 = vsel %vm111, %v1399, 0
  %1405 = vmatpush.msra.mxu0 0.0
  %1406 = vmatpush.msra.mxu0 0.0
  %1407 = vmatpush.msra.mxu0 0.0
  %1408 = vmatpush.msra.mxu0 0.0
  %1409 = vmatpush.msra.mxu0 0.0
  %1410 = vmatpush.msra.mxu0 0.0
  %1411 = vmatpush.msra.mxu0 0.0
  %1412 = vmatpush.msra.mxu0 0.0
  %1413 = vmatpush.msra.mxu0 0.0
  %1414 = vmatpush.msra.mxu0 0.0
  %1415 = vmatpush.msra.mxu0 0.0
  %1416 = vmatpush.msra.mxu0 0.0
  %1417 = vmatpush.msra.mxu0 %v845
  %1418 = vmatpush.msra.mxu0 %v844
  %1419 = vmatpush.msra.mxu0 %v843
  %1420 = vmatpush.msra.mxu0 %v842
  %1421 = vmatmul.f32.gmra.mxu0 %v1403
  %v1422 = vpop.f32.mrf.mxu0
  %v1423 = vadd.f32 0.0, %v1422
  %1424 = vdwg.mxu0
  %v1425 = vadd.f32 %v1401, %v1423
  %v1426 = vxor.u32 %v1425, 2147483648
  %v1427 = vmul.f32 %v1426, 1.442695
  %v1428 = vpow.pop %v1427
  %v1429 = vadd.f32 %v1428, 1.0
  %v1430 = vrcp.pop %v1429
  %v1431 = vmul.f32 %v1429, %v1430
  %v1432 = vsub.f32 1.0, %v1431
  %v1433 = vmul.f32 %v1430, %v1432
  %v1434 = vadd.f32 %v1430, %v1433
  %vm1435 = vweird.f32 %v1429
  %vm1436 = vweird.f32 %v1430
  %vm1437 = vmor %vm1435, %vm1436
  %v1438 = vsel %vm1437, %v1430, %v1434
  %v1439 = vand.u32 2147483647, %v1429
  %vm1440 = vcmp.eq.f32.partialorder %v1439, 8.507059e+37
  %v1441 = vand.u32 %v1429, 2147483648
  %v1442 = vor.u32 1.1754944e-38, %v1441
  %v1443 = vsel %vm1440, %v1442, %v1438
  %v1444 = vmul.f32 1.0, %v1443
  %v1445 = vtanh.pop %v1425
  %1447 = vrot.lane.b32.xlu0 %v1400, 32
  %v1448 = vpop.permute.xlu0 %1447
  %v1450 = vmul.f32 %v1444, %v1448
  %1452 = vrot.lane.b32.xlu0 %v1445, 64
  %v1453 = vpop.permute.xlu0 %1452
  %v1455 = vmul.f32 %v1444, %v1453
  %1457 = vrot.lane.b32.xlu0 %v1455, 32
  %v1458 = vpop.permute.xlu0 %1457
  %v1460 = vadd.f32 %v1450, %v1458
  %v1461 = vtanh.pop %v1460
  %1463 = vrot.lane.b32.xlu0 %v1461, 64
  %v1464 = vpop.permute.xlu0 %1463
  %v1466 = vmul.f32 %v1444, %v1464
  %1468 = vrot.lane.b32.xlu0 %v1460, 96
  %v1469 = vpop.permute.xlu0 %1468
  %1471 = vst.msk [vmem:[#allocation5] sm:$0xff] %vm111, %v1469
  %1473 = vrot.lane.b32.xlu0 %v1466, 32
  %v1474 = vpop.permute.xlu0 %1473
  %1476 = vst.msk [vmem:[#allocation4] sm:$0xff] %vm111, %v1474
  %1477 = vst.msk [vmem:[#allocation3 + $0x38] sm:$0xff] %vm111, %v1474
  %v1478 = vld [vmem:[#allocation3] sm:$0xff]
  %v1479 = vld [vmem:[#allocation3 + $0x8] sm:$0xff]
  %v1480 = vld [vmem:[#allocation3 + $0x10] sm:$0xff]
  %v1481 = vld [vmem:[#allocation3 + $0x18] sm:$0xff]
  %v1482 = vld [vmem:[#allocation3 + $0x20] sm:$0xff]
  %v1483 = vld [vmem:[#allocation3 + $0x28] sm:$0xff]
  %v1484 = vld [vmem:[#allocation3 + $0x30] sm:$0xff]
  %v1485 = vld [vmem:[#allocation3 + $0x38] sm:$0xff]
  %1486 = vst.msk [vmem:[%s6] sm:$0xff] %vm111, %v1478
  %1487 = vst.msk [vmem:[%s6 + $0x8] sm:$0xff] %vm111, %v1479
  %1488 = vst.msk [vmem:[%s6 + $0x10] sm:$0xff] %vm111, %v1480
  %1489 = vst.msk [vmem:[%s6 + $0x18] sm:$0xff] %vm111, %v1481
  %1490 = vst.msk [vmem:[%s6 + $0x20] sm:$0xff] %vm111, %v1482
  %1491 = vst.msk [vmem:[%s6 + $0x28] sm:$0xff] %vm111, %v1483
  %1492 = vst.msk [vmem:[%s6 + $0x30] sm:$0xff] %vm111, %v1484
  %1493 = vst.msk [vmem:[%s6 + $0x38] sm:$0xff] %vm111, %v1485
  // Predicated region
  $region26: #{vanilla_lstm_forward.1} parent=0 // pred_check
    _
  $region27: #{vanilla_lstm_forward.1} parent=0 // pred_check_branch
    %1495 = sbr.rel (0) target = $region29
  $region28: #{vanilla_lstm_forward.1} parent=0 // pred_region
    _
  $region29: #{vanilla_lstm_forward.1} parent=0 // pred_fallthru
    _
  // Predicated region
  $region30: #{vanilla_lstm_forward.1} parent=0 // pred_check
    _
  $region31: #{vanilla_lstm_forward.1} parent=0 // pred_check_branch
    %1497 = sbr.rel (0) target = $region33
  $region32: #{vanilla_lstm_forward.1} parent=0 // pred_region
    _
  $region33: #{vanilla_lstm_forward.1} parent=0 // pred_fallthru
    _

</llo_original>
